<compile_context>
chip_gen: v5e
topology: v5e:2x2
jax: 0.10.0
libtpu: 0.0.40
codegen_flags: <defaults>
</compile_context>

<pallas_src>
import functools

import jax
import jax.numpy as jnp
from jax.experimental import pallas as pl
from jax.experimental.pallas import tpu as pltpu


def _round_up(x, m):
    return ((x + m - 1) // m) * m


def _vmem_limit_bytes():
    """Per-generation scoped-VMEM limit (v7x has 64 MiB physical vs 128 MiB)."""
    try:
        cap = int(pltpu.get_tpu_info().vmem_capacity_bytes)
    except Exception:
        cap = 64 * 1024 * 1024
    return max(32 * 1024 * 1024, min(cap // 2, 64 * 1024 * 1024))


def _pick_node_tiling(n, tile_nodes=512):
    """Pad the node dim and pick (tm, tk) so both divide n_pad.

    tm is the row tile (sublane dim of A / out blocks), tk the contraction
    tile (lane dim of A blocks, multiple of 128). Keep >= 2 row blocks so the
    'parallel' row axis can shard across v7x's two TensorCores.
    """
    if n <= 256:
        n_pad = 256
    else:
        n_pad = _round_up(n, tile_nodes)
    tk = min(tile_nodes, n_pad)
    tm = tk
    if n_pad // tm < 2:
        tm = max(128, tm // 2)
    return n_pad, tm, tk


def _pick_channel_tile(c_pad):
    """256-wide output tiles when channels allow (full MXU width on v6e/v7x)."""
    return 256 if c_pad % 256 == 0 else 128


# ------------------------------- kernels -------------------------------------


def _gcn_layer_kernel(a_ref, x_ref, w_ref, b_ref, o_ref, acc_ref,
                      *, relu, x_resident, tk):
    """One (i, j, k) grid step of  out = act(A @ (X @ W) + b), bf16 output.

    f32 VMEM accumulator; bias/activation only in the k==last finalize branch.
    """
    k = pl.program_id(2)

    @pl.when(k == 0)
    def _():
        acc_ref[...] = jnp.zeros_like(acc_ref)

    if x_resident:
        row = pl.multiple_of(k * tk, tk)
        x_tile = x_ref[pl.ds(row, tk), :]
    else:
        x_tile = x_ref[...]

    # Fused right-hand matmul: W is VMEM-resident; compute XW on-tile in f32,
    # cast to bf16 for the (memory-bound) A matmul — MXU has slack here.
    xw = jnp.dot(x_tile, w_ref[...],
                 preferred_element_type=jnp.float32).astype(a_ref.dtype)
    acc_ref[...] += jnp.dot(a_ref[...], xw, preferred_element_type=jnp.float32)

    @pl.when(k == pl.num_programs(2) - 1)
    def _():
        out = acc_ref[...] + b_ref[...].astype(jnp.float32)
        if relu:
            out = jnp.maximum(out, 0.0)
        o_ref[...] = out.astype(o_ref.dtype)


def _gcn_layer_kernel_f32(a_ref, x_ref, w_ref, b_ref, o_ref,
                          *, relu, x_resident, tk):
    """Same, but f32 output: accumulate directly into the resident o_ref block
    (out block index is constant along k), no separate scratch."""
    k = pl.program_id(2)

    @pl.when(k == 0)
    def _():
        o_ref[...] = jnp.zeros_like(o_ref)

    if x_resident:
        row = pl.multiple_of(k * tk, tk)
        x_tile = x_ref[pl.ds(row, tk), :]
    else:
        x_tile = x_ref[...]

    xw = jnp.dot(x_tile, w_ref[...],
                 preferred_element_type=jnp.float32).astype(a_ref.dtype)
    o_ref[...] += jnp.dot(a_ref[...], xw, preferred_element_type=jnp.float32)

    @pl.when(k == pl.num_programs(2) - 1)
    def _():
        out = o_ref[...] + b_ref[...].astype(jnp.float32)
        if relu:
            out = jnp.maximum(out, 0.0)
        o_ref[...] = out


def _gcn_layer(a_p, x_p, w_p, b_p, *, tm, tk, tn, out_dtype, relu):
    """Fused GCN layer:  act(A_pad @ (X_pad @ W_pad) + b_pad)  via one pallas_call."""
    n_pad = a_p.shape[0]
    ci_pad = x_p.shape[1]
    h_pad = w_p.shape[1]
    assert a_p.shape == (n_pad, n_pad)
    assert x_p.shape == (n_pad, ci_pad) and w_p.shape[0] == ci_pad
    assert n_pad % tm == 0 and n_pad % tk == 0 and h_pad % tn == 0

    num_i, num_j, num_k = n_pad // tm, h_pad // tn, n_pad // tk

    vmem_limit = _vmem_limit_bytes()

    def nbytes(a):
        return a.size * a.dtype.itemsize

    # Keep the skinny X panel fully VMEM-resident (read once) when it fits;
    # fall back to per-k streaming for very large graphs.
    x_resident = nbytes(x_p) <= vmem_limit // 4
    if x_resident:
        x_spec = pl.BlockSpec((n_pad, ci_pad), lambda i, j, k: (0, 0))
    else:
        x_spec = pl.BlockSpec((tk, ci_pad), lambda i, j, k: (k, 0))

    f32_out = jnp.dtype(out_dtype) == jnp.float32
    if f32_out:
        kernel = functools.partial(_gcn_layer_kernel_f32, relu=relu,
                                   x_resident=x_resident, tk=tk)
        scratch = []
    else:
        kernel = functools.partial(_gcn_layer_kernel, relu=relu,
                                   x_resident=x_resident, tk=tk)
        scratch = [pltpu.VMEM((tm, tn), jnp.float32)]

    x_bytes = nbytes(x_p) if x_resident else num_i * num_j * nbytes(x_p)
    cost = pl.CostEstimate(
        flops=2 * n_pad * n_pad * h_pad + 2 * num_i * n_pad * ci_pad * h_pad,
        transcendentals=0,
        bytes_accessed=int(
            num_j * nbytes(a_p)                          # A re-read per j tile
            + x_bytes
            + num_i * (nbytes(w_p) + nbytes(b_p))        # small resident panels
            + n_pad * h_pad * jnp.dtype(out_dtype).itemsize
        ),
    )

    return pl.pallas_call(
        kernel,
        out_shape=jax.ShapeDtypeStruct((n_pad, h_pad), out_dtype),
        grid_spec=pltpu.PrefetchScalarGridSpec(
            num_scalar_prefetch=0,
            grid=(num_i, num_j, num_k),
            in_specs=[
                pl.BlockSpec((tm, tk), lambda i, j, k: (i, k)),   # A tile
                x_spec,                                           # X panel/tile
                pl.BlockSpec((ci_pad, tn), lambda i, j, k: (0, j)),  # W (resident)
                pl.BlockSpec((1, tn), lambda i, j, k: (0, j)),       # bias
            ],
            out_specs=pl.BlockSpec((tm, tn), lambda i, j, k: (i, j)),
            scratch_shapes=scratch,
        ),
        compiler_params=pltpu.CompilerParams(
            dimension_semantics=("parallel", "parallel", "arbitrary"),
            vmem_limit_bytes=vmem_limit,
        ),
        cost_estimate=cost,
    )(a_p, x_p, w_p, b_p)


# ---------------------------- graph / params ---------------------------------


def gcn_norm_dense(edge_index, num_nodes):
    """Dense D^{-1/2} (A + I) D^{-1/2}, matching PyG GCNConv's gcn_norm.

    Glue code (scatter into a dense matrix); the matmul hot path is Pallas.
    """
    src = edge_index[0]
    dst = edge_index[1]
    a = jnp.zeros((num_nodes, num_nodes), jnp.float32)
    a = a.at[dst, src].add(1.0)                      # A[target, source] += 1
    a = a + jnp.eye(num_nodes, dtype=jnp.float32)    # self loops
    deg = a.sum(axis=1)
    dinv = jnp.where(deg > 0, 1.0 / jnp.sqrt(deg), 0.0)
    return dinv[:, None] * a * dinv[None, :]


def pad_adjacency(a_hat, num_nodes, *, tile_nodes=512):
    """Pad + bf16-cast A_hat once per graph (hoisted out of every forward)."""
    n_pad, tm, tk = _pick_node_tiling(num_nodes, tile_nodes)
    a_p = jnp.zeros((n_pad, n_pad), jnp.bfloat16)
    a_p = a_p.at[:num_nodes, :num_nodes].set(a_hat.astype(jnp.bfloat16))
    return a_p, (n_pad, tm, tk)


def prepare_params(params):
    """Pad/cast weights & biases once (static per model, hoisted out of forward)."""
    w1, b1, w2, b2 = params
    c_in, hidden = w1.shape
    c_out = w2.shape[1]
    ci_pad = _round_up(c_in, 128)
    h_pad = _round_up(hidden, 128)
    co_pad = _round_up(c_out, 128)
    bf16 = jnp.bfloat16
    w1_p = jnp.zeros((ci_pad, h_pad), bf16).at[:c_in, :hidden].set(w1.astype(bf16))
    b1_p = jnp.zeros((1, h_pad), jnp.float32).at[:, :hidden].set(b1.reshape(1, -1))
    w2_p = jnp.zeros((h_pad, co_pad), bf16).at[:hidden, :c_out].set(w2.astype(bf16))
    b2_p = jnp.zeros((1, co_pad), jnp.float32).at[:, :c_out].set(b2.reshape(1, -1))
    return (w1_p, b1_p, w2_p, b2_p)


# ------------------------------- forward --------------------------------------


def encoder_forward(x, a_p, padded_params, *, num_nodes, out_channels, tiling):
    """Pallas-backed forward of Encoder(in_channels, out_channels).

    out = A_hat @ relu(A_hat @ (X @ W1) + b1) @ W2 + b2
    (two fused pallas_calls; bf16 MXU inputs, f32 accumulation).
    """
    w1_p, b1_p, w2_p, b2_p = padded_params
    n_pad, tm, tk = tiling
    ci_pad = w1_p.shape[0]
    h_pad = w1_p.shape[1]
    co_pad = w2_p.shape[1]
    bf16 = jnp.bfloat16

    # Only the (small) feature matrix is padded per forward; A/W/b are hoisted.
    x_p = jnp.zeros((n_pad, ci_pad), bf16)
    x_p = x_p.at[:num_nodes, :x.shape[1]].set(x.astype(bf16))

    h1 = _gcn_layer(a_p, x_p, w1_p, b1_p,
                    tm=tm, tk=tk, tn=_pick_channel_tile(h_pad),
                    out_dtype=bf16, relu=True)
    out = _gcn_layer(a_p, h1, w2_p, b2_p,
                     tm=tm, tk=tk, tn=_pick_channel_tile(co_pad),
                     out_dtype=jnp.float32, relu=False)

    return out[:num_nodes, :out_channels]


# ------------------------------ test glue -------------------------------------


def init_params(key, in_channels, out_channels):
    """Glorot-uniform weights + small random biases (deterministic)."""
    hidden = 2 * out_channels
    k1, k2, k3, k4 = jax.random.split(key, 4)

    def glorot(k, fan_in, fan_out):
        limit = jnp.sqrt(6.0 / (fan_in + fan_out))
        return jax.random.uniform(k, (fan_in, fan_out), jnp.float32, -limit, limit)

    w1 = glorot(k1, in_channels, hidden)
    b1 = jax.random.uniform(k3, (1, hidden), jnp.float32, -0.1, 0.1)
    w2 = glorot(k2, hidden, out_channels)
    b2 = jax.random.uniform(k4, (1, out_channels), jnp.float32, -0.1, 0.1)
    return (w1, b1, w2, b2)


def reference_forward(x, a_hat, params):
    """Pure-JAX reference mimicking the kernel's bf16-in / f32-accumulate math."""
    w1, b1, w2, b2 = params
    bf16 = jnp.bfloat16
    ab = a_hat.astype(bf16)
    xw1 = jnp.dot(x.astype(bf16), w1.astype(bf16),
                  preferred_element_type=jnp.float32).astype(bf16)
    h1 = jnp.maximum(
        jnp.dot(ab, xw1, preferred_element_type=jnp.float32) + b1.reshape(1, -1),
        0.0,
    ).astype(bf16)
    hw2 = jnp.dot(h1, w2.astype(bf16),
                  preferred_element_type=jnp.float32).astype(bf16)
    return jnp.dot(ab, hw2, preferred_element_type=jnp.float32) + b2.reshape(1, -1)


if __name__ == "__main__":
    key = jax.random.PRNGKey(0)
    k_x, k_e, k_p = jax.random.split(key, 3)

    num_nodes = 8
    in_channels = 4
    out_channels = 8
    num_edges = 16

    x = jax.random.normal(k_x, (num_nodes, in_channels), jnp.float32)
    edge_index = jax.random.randint(k_e, (2, num_edges), 0, num_nodes, jnp.int32)
    params = init_params(k_p, in_channels, out_channels)

    # Built once per graph / model, outside the per-forward hot path.
    a_hat = gcn_norm_dense(edge_index, num_nodes)
    a_p, tiling = pad_adjacency(a_hat, num_nodes)
    padded_params = prepare_params(params)

    fwd = jax.jit(functools.partial(
        encoder_forward, num_nodes=num_nodes, out_channels=out_channels,
        tiling=tiling))
    out = jax.block_until_ready(fwd(x, a_p, padded_params))

    ref = reference_forward(x, a_hat, params)
    assert out.shape == (num_nodes, out_channels)
    err = float(jnp.max(jnp.abs(out - ref)))
    assert jnp.allclose(out, ref, atol=1e-2, rtol=1e-2), err

    print("KERNEL_OK")
</pallas_src>

<mosaic_0001>
module attributes {stable_mosaic.version = 11 : i64} {
  func.func @_gcn_layer_kernel(%arg0: i32, %arg1: i32, %arg2: i32, %arg3: memref<128x256xbf16, #tpu.memory_space<vmem>>, %arg4: memref<256x128xbf16, #tpu.memory_space<vmem>>, %arg5: memref<128x128xbf16, #tpu.memory_space<vmem>>, %arg6: memref<1x128xf32, #tpu.memory_space<vmem>>, %arg7: memref<128x128xbf16, #tpu.memory_space<vmem>>, %arg8: memref<128x128xf32, #tpu.memory_space<vmem>>) attributes {dimension_semantics = [#tpu.dimension_semantics<parallel>, #tpu.dimension_semantics<parallel>, #tpu.dimension_semantics<arbitrary>], iteration_bounds = array<i64: 2, 1, 1>, scalar_prefetch = 0 : i64, scratch_operands = 1 : i64, tpu.core_type = #tpu.core_type<tc>, window_params = [{transform_indices = @transform_0, window_bounds = array<i64: 128, 256>}, {pipeline_mode = #tpu.pipeline_mode<synchronous>, transform_indices = @transform_1, window_bounds = array<i64: 256, 128>}, {transform_indices = @transform_2, window_bounds = array<i64: 128, 128>}, {transform_indices = @transform_3, window_bounds = array<i64: 1, 128>}, {transform_indices = @transform_4, window_bounds = array<i64: 128, 128>}]} {
    %c0_i32 = arith.constant 0 : i32
    %0 = arith.cmpi eq, %arg2, %c0_i32 : i32
    %1 = arith.extui %0 : i1 to i32
    %c0_i32_0 = arith.constant 0 : i32
    %2 = arith.cmpi ne, %1, %c0_i32_0 : i32
    scf.if %2 {
      %cst_12 = arith.constant 0.000000e+00 : f32
      %18 = vector.broadcast %cst_12 : f32 to vector<128x128xf32>
      %c0_13 = arith.constant 0 : index
      %c0_14 = arith.constant 0 : index
      %19 = vector.load %arg8[%c0_13, %c0_14] : memref<128x128xf32, #tpu.memory_space<vmem>>, vector<128x128xf32>
      tpu.vector_store %arg8[%c0_13, %c0_14], %18 {strides = array<i32>} : memref<128x128xf32, #tpu.memory_space<vmem>>, vector<128x128xf32>,
    } else {
    }
    %c256_i32 = arith.constant 256 : i32
    %3 = arith.muli %arg2, %c256_i32 : i32
    %4 = tpu.assume_multiple %3, 256 : i32
    %5 = arith.index_cast %4 : i32 to index
    %c0 = arith.constant 0 : index
    %6 = vector.load %arg4[%5, %c0] : memref<256x128xbf16, #tpu.memory_space<vmem>>, vector<256x128xbf16>
    %c0_1 = arith.constant 0 : index
    %c0_2 = arith.constant 0 : index
    %7 = vector.load %arg5[%c0_1, %c0_2] : memref<128x128xbf16, #tpu.memory_space<vmem>>, vector<128x128xbf16>
    %cst = arith.constant dense<0.000000e+00> : vector<256x128xf32>
    %8 = tpu.matmul %6, %7, %cst {dimension_numbers = #tpu.dot_dimension_numbers<[1], [0], [0], [1], [0, 0, 1, 1], [], []>} : vector<256x128xbf16>, vector<128x128xbf16>, vector<256x128xf32> -> vector<256x128xf32>
    %9 = arith.truncf %8 : vector<256x128xf32> to vector<256x128xbf16>
    %c0_3 = arith.constant 0 : index
    %c0_4 = arith.constant 0 : index
    %10 = vector.load %arg8[%c0_3, %c0_4] : memref<128x128xf32, #tpu.memory_space<vmem>>, vector<128x128xf32>
    %c0_5 = arith.constant 0 : index
    %c0_6 = arith.constant 0 : index
    %11 = vector.load %arg3[%c0_5, %c0_6] : memref<128x256xbf16, #tpu.memory_space<vmem>>, vector<128x256xbf16>
    %cst_7 = arith.constant dense<0.000000e+00> : vector<128x128xf32>
    %12 = tpu.matmul %11, %9, %cst_7 {dimension_numbers = #tpu.dot_dimension_numbers<[1], [0], [0], [1], [0, 0, 1, 1], [], []>} : vector<128x256xbf16>, vector<256x128xbf16>, vector<128x128xf32> -> vector<128x128xf32>
    %13 = arith.addf %10, %12 : vector<128x128xf32>
    %c0_8 = arith.constant 0 : index
    %c0_9 = arith.constant 0 : index
    %14 = vector.load %arg8[%c0_8, %c0_9] : memref<128x128xf32, #tpu.memory_space<vmem>>, vector<128x128xf32>
    tpu.vector_store %arg8[%c0_8, %c0_9], %13 {strides = array<i32>} : memref<128x128xf32, #tpu.memory_space<vmem>>, vector<128x128xf32>,
    %c0_i32_10 = arith.constant 0 : i32
    %15 = arith.cmpi eq, %arg2, %c0_i32_10 : i32
    %16 = arith.extui %15 : i1 to i32
    %c0_i32_11 = arith.constant 0 : i32
    %17 = arith.cmpi ne, %16, %c0_i32_11 : i32
    scf.if %17 {
      %c0_12 = arith.constant 0 : index
      %c0_13 = arith.constant 0 : index
      %18 = vector.load %arg8[%c0_12, %c0_13] : memref<128x128xf32, #tpu.memory_space<vmem>>, vector<128x128xf32>
      %c0_14 = arith.constant 0 : index
      %c0_15 = arith.constant 0 : index
      %19 = vector.load %arg6[%c0_14, %c0_15] : memref<1x128xf32, #tpu.memory_space<vmem>>, vector<1x128xf32>
      %20 = vector.broadcast %19 : vector<1x128xf32> to vector<128x128xf32>
      %21 = arith.addf %18, %20 : vector<128x128xf32>
      %cst_16 = arith.constant 0.000000e+00 : f32
      %22 = vector.broadcast %cst_16 : f32 to vector<128x128xf32>
      %23 = arith.maximumf %21, %22 : vector<128x128xf32>
      %24 = arith.truncf %23 : vector<128x128xf32> to vector<128x128xbf16>
      %c0_17 = arith.constant 0 : index
      %c0_18 = arith.constant 0 : index
      %25 = vector.load %arg7[%c0_17, %c0_18] : memref<128x128xbf16, #tpu.memory_space<vmem>>, vector<128x128xbf16>
      tpu.vector_store %arg7[%c0_17, %c0_18], %24 {strides = array<i32>} : memref<128x128xbf16, #tpu.memory_space<vmem>>, vector<128x128xbf16>,
    } else {
    }
    return
  }
  func.func @transform_0(%arg0: i32, %arg1: i32, %arg2: i32) -> (i32, i32) {
    %c0_i32 = arith.constant 0 : i32
    return %arg0, %arg2 : i32, i32
  }
  func.func @transform_1(%arg0: i32, %arg1: i32, %arg2: i32) -> (i32, i32) {
    %c0_i32 = arith.constant 0 : i32
    %c0_i32_0 = arith.constant 0 : i32
    %c0_i32_1 = arith.constant 0 : i32
    return %c0_i32, %c0_i32_0 : i32, i32
  }
  func.func @transform_2(%arg0: i32, %arg1: i32, %arg2: i32) -> (i32, i32) {
    %c0_i32 = arith.constant 0 : i32
    %c0_i32_0 = arith.constant 0 : i32
    return %c0_i32, %arg1 : i32, i32
  }
  func.func @transform_3(%arg0: i32, %arg1: i32, %arg2: i32) -> (i32, i32) {
    %c0_i32 = arith.constant 0 : i32
    %c0_i32_0 = arith.constant 0 : i32
    return %c0_i32, %arg1 : i32, i32
  }
  func.func @transform_4(%arg0: i32, %arg1: i32, %arg2: i32) -> (i32, i32) {
    %c0_i32 = arith.constant 0 : i32
    return %arg0, %arg1 : i32, i32
  }
}

module attributes {stable_mosaic.version = 11 : i64} {
  func.func @_gcn_layer_kernel_f32(%arg0: i32, %arg1: i32, %arg2: i32, %arg3: memref<128x256xbf16, #tpu.memory_space<vmem>>, %arg4: memref<256x128xbf16, #tpu.memory_space<vmem>>, %arg5: memref<128x128xbf16, #tpu.memory_space<vmem>>, %arg6: memref<1x128xf32, #tpu.memory_space<vmem>>, %arg7: memref<128x128xf32, #tpu.memory_space<vmem>>) attributes {dimension_semantics = [#tpu.dimension_semantics<parallel>, #tpu.dimension_semantics<parallel>, #tpu.dimension_semantics<arbitrary>], iteration_bounds = array<i64: 2, 1, 1>, scalar_prefetch = 0 : i64, scratch_operands = 0 : i64, tpu.core_type = #tpu.core_type<tc>, window_params = [{transform_indices = @transform_0, window_bounds = array<i64: 128, 256>}, {pipeline_mode = #tpu.pipeline_mode<synchronous>, transform_indices = @transform_1, window_bounds = array<i64: 256, 128>}, {transform_indices = @transform_2, window_bounds = array<i64: 128, 128>}, {transform_indices = @transform_3, window_bounds = array<i64: 1, 128>}, {transform_indices = @transform_4, window_bounds = array<i64: 128, 128>}]} {
    %c0_i32 = arith.constant 0 : i32
    %0 = arith.cmpi eq, %arg2, %c0_i32 : i32
    %1 = arith.extui %0 : i1 to i32
    %c0_i32_0 = arith.constant 0 : i32
    %2 = arith.cmpi ne, %1, %c0_i32_0 : i32
    scf.if %2 {
      %cst_12 = arith.constant 0.000000e+00 : f32
      %18 = vector.broadcast %cst_12 : f32 to vector<128x128xf32>
      %c0_13 = arith.constant 0 : index
      %c0_14 = arith.constant 0 : index
      %19 = vector.load %arg7[%c0_13, %c0_14] : memref<128x128xf32, #tpu.memory_space<vmem>>, vector<128x128xf32>
      tpu.vector_store %arg7[%c0_13, %c0_14], %18 {strides = array<i32>} : memref<128x128xf32, #tpu.memory_space<vmem>>, vector<128x128xf32>,
    } else {
    }
    %c256_i32 = arith.constant 256 : i32
    %3 = arith.muli %arg2, %c256_i32 : i32
    %4 = tpu.assume_multiple %3, 256 : i32
    %5 = arith.index_cast %4 : i32 to index
    %c0 = arith.constant 0 : index
    %6 = vector.load %arg4[%5, %c0] : memref<256x128xbf16, #tpu.memory_space<vmem>>, vector<256x128xbf16>
    %c0_1 = arith.constant 0 : index
    %c0_2 = arith.constant 0 : index
    %7 = vector.load %arg5[%c0_1, %c0_2] : memref<128x128xbf16, #tpu.memory_space<vmem>>, vector<128x128xbf16>
    %cst = arith.constant dense<0.000000e+00> : vector<256x128xf32>
    %8 = tpu.matmul %6, %7, %cst {dimension_numbers = #tpu.dot_dimension_numbers<[1], [0], [0], [1], [0, 0, 1, 1], [], []>} : vector<256x128xbf16>, vector<128x128xbf16>, vector<256x128xf32> -> vector<256x128xf32>
    %9 = arith.truncf %8 : vector<256x128xf32> to vector<256x128xbf16>
    %c0_3 = arith.constant 0 : index
    %c0_4 = arith.constant 0 : index
    %10 = vector.load %arg7[%c0_3, %c0_4] : memref<128x128xf32, #tpu.memory_space<vmem>>, vector<128x128xf32>
    %c0_5 = arith.constant 0 : index
    %c0_6 = arith.constant 0 : index
    %11 = vector.load %arg3[%c0_5, %c0_6] : memref<128x256xbf16, #tpu.memory_space<vmem>>, vector<128x256xbf16>
    %cst_7 = arith.constant dense<0.000000e+00> : vector<128x128xf32>
    %12 = tpu.matmul %11, %9, %cst_7 {dimension_numbers = #tpu.dot_dimension_numbers<[1], [0], [0], [1], [0, 0, 1, 1], [], []>} : vector<128x256xbf16>, vector<256x128xbf16>, vector<128x128xf32> -> vector<128x128xf32>
    %13 = arith.addf %10, %12 : vector<128x128xf32>
    %c0_8 = arith.constant 0 : index
    %c0_9 = arith.constant 0 : index
    %14 = vector.load %arg7[%c0_8, %c0_9] : memref<128x128xf32, #tpu.memory_space<vmem>>, vector<128x128xf32>
    tpu.vector_store %arg7[%c0_8, %c0_9], %13 {strides = array<i32>} : memref<128x128xf32, #tpu.memory_space<vmem>>, vector<128x128xf32>,
    %c0_i32_10 = arith.constant 0 : i32
    %15 = arith.cmpi eq, %arg2, %c0_i32_10 : i32
    %16 = arith.extui %15 : i1 to i32
    %c0_i32_11 = arith.constant 0 : i32
    %17 = arith.cmpi ne, %16, %c0_i32_11 : i32
    scf.if %17 {
      %c0_12 = arith.constant 0 : index
      %c0_13 = arith.constant 0 : index
      %18 = vector.load %arg7[%c0_12, %c0_13] : memref<128x128xf32, #tpu.memory_space<vmem>>, vector<128x128xf32>
      %c0_14 = arith.constant 0 : index
      %c0_15 = arith.constant 0 : index
      %19 = vector.load %arg6[%c0_14, %c0_15] : memref<1x128xf32, #tpu.memory_space<vmem>>, vector<1x128xf32>
      %20 = vector.broadcast %19 : vector<1x128xf32> to vector<128x128xf32>
      %21 = arith.addf %18, %20 : vector<128x128xf32>
      %c0_16 = arith.constant 0 : index
      %c0_17 = arith.constant 0 : index
      %22 = vector.load %arg7[%c0_16, %c0_17] : memref<128x128xf32, #tpu.memory_space<vmem>>, vector<128x128xf32>
      tpu.vector_store %arg7[%c0_16, %c0_17], %21 {strides = array<i32>} : memref<128x128xf32, #tpu.memory_space<vmem>>, vector<128x128xf32>,
    } else {
    }
    return
  }
  func.func @transform_0(%arg0: i32, %arg1: i32, %arg2: i32) -> (i32, i32) {
    %c0_i32 = arith.constant 0 : i32
    return %arg0, %arg2 : i32, i32
  }
  func.func @transform_1(%arg0: i32, %arg1: i32, %arg2: i32) -> (i32, i32) {
    %c0_i32 = arith.constant 0 : i32
    %c0_i32_0 = arith.constant 0 : i32
    %c0_i32_1 = arith.constant 0 : i32
    return %c0_i32, %c0_i32_0 : i32, i32
  }
  func.func @transform_2(%arg0: i32, %arg1: i32, %arg2: i32) -> (i32, i32) {
    %c0_i32 = arith.constant 0 : i32
    %c0_i32_0 = arith.constant 0 : i32
    return %c0_i32, %arg1 : i32, i32
  }
  func.func @transform_3(%arg0: i32, %arg1: i32, %arg2: i32) -> (i32, i32) {
    %c0_i32 = arith.constant 0 : i32
    %c0_i32_0 = arith.constant 0 : i32
    return %c0_i32, %arg1 : i32, i32
  }
  func.func @transform_4(%arg0: i32, %arg1: i32, %arg2: i32) -> (i32, i32) {
    %c0_i32 = arith.constant 0 : i32
    return %arg0, %arg1 : i32, i32
  }
}

</mosaic_0001>

<llo_original>
// kernel: encoder_forward.2
$region0: #{encoder_forward.2}
  #allocation0 [shape = 'u32[]', space=smem, size = 0x4, offset = 0x4, fixed_abs, tag = 'smem constant byte address 0x4 - core index']
  #allocation1 [shape = 'u32[72,128]{1,0:T(1,128)}', space=vmem, size = 0x9000, scoped, tag = 'internal scratch']
  #allocation2 [shape = 'f32[128,128]{1,0:T(8,128)}', space=vmem, size = 0x10000, scoped, tag = 'scratch operand']
  %s0 = inlined_call_operand.hbm [shape: bf16[256,256], index: 0, kind: input, shape index: {}]
  %s1 = inlined_call_operand.vmem [shape: bf16[256,128], index: 1, kind: input, shape index: {}]
  %s2 = inlined_call_operand.vmem [shape: bf16[128,128], index: 2, kind: input, shape index: {}]
  %s3 = inlined_call_operand.vmem [shape: f32[1,128], index: 3, kind: input, shape index: {}]
  %s4 = inlined_call_operand.vmem [shape: bf16[256,128], index: 4, kind: output, shape index: {}]
  %s5 = sld [smem:[#allocation0]]
  $region61: #{encoder_forward.2} parent=0
    _
  %s7 = ssub.s32 1, %s5
  %s8 = scalar_select 0, %s7, %s5
  $region1: #{encoder_forward.2} parent=0
    #allocation3 [shape = 'u8[131072]{0}', space=vmem, size = 0x20000, scoped, tag = 'input window, operand 0']
    #allocation4 [shape = 's32[2]{0}', space=sflag, size = 0x8, scoped, tag = 'scoped memory for encoder_forward.2']
    %9 = vsyncpa [#allocation4], 0
    %s10 = scalar_lea.sflag [#allocation4], 1
    %11 = vsyncpa %s10, 0
    loop: start=0, step=1, limit=4
    $region2: #{encoder_forward.2} parent=1 // loop_pre_header
      _
    $region3: #{encoder_forward.2} parent=1 // loop_header
      %s13 = sphi 0, %s17
      %p14 = scmp.ge.s32.totalorder %s13, 4
      %s20 = sphi 0, %s39
      %s21 = sphi 0, %s35
      %s22 = sphi 0, %s31
      %s23 = sphi 0, %s20
      %s24 = sphi 0, %s21
      %s25 = sphi 0, %s22
      %s26 = sphi 0, %s23
      %s27 = sphi 0, %s24
      %s28 = sphi 0, %s25
      %s44 = sphi 0, %s46
      %s47 = sphi 0, %s44
      %s48 = sphi 0, %s47
      %s64 = sphi 0, %s48
      %s68 = sphi 0, %s68
      %s70 = sphi 0, %s68
      %s71 = sphi 0, %s70
      %s85 = sphi 0, %s71
      %s91 = sphi 0, %s93
      %s94 = sphi 0, %s91
      %s95 = sphi 0, %s94
      %s111 = sphi 0, %s95
      %s117 = sphi 0, %s119
      %s120 = sphi 0, %s117
      %s121 = sphi 0, %s120
      %s137 = sphi 0, %s121
      %s145 = sphi 0, %s147
      %s148 = sphi 0, %s145
      %s149 = sphi 0, %s148
      %s165 = sphi 0, %s149
    $region4: #{encoder_forward.2} parent=1 // loop_header_branch
      %16 = sbr.rel (%p14) target = $region8
    $region5: #{encoder_forward.2} parent=1 // loop_body
      %s18 = ssub.s32 %s13, 1
      %s19 = ssub.s32 %s13, 2
      %s29 = sadd.s32 1, %s22
      %p30 = scmp.ge.s32.totalorder %s29, 1
      %s31 = scalar_select %p30, 0, %s29
      %s32 = sadd.s32 1, %s21
      %s33 = scalar_select %p30, %s32, %s21
      %p34 = scmp.ge.s32.totalorder %s33, 1
      %s35 = scalar_select %p34, 0, %s33
      %s36 = sadd.s32 1, %s20
      %s37 = scalar_select %p34, %s36, %s20
      %p38 = scmp.ge.s32.totalorder %s37, 2
      %s39 = scalar_select %p38, 0, %s37
      %s40 = ssub.s32 %s20, %s39
      %s41 = ssub.s32 %s22, %s31
      %s42 = sor.u32 %s40, %s41
      %p43 = scmp.eq.s32.totalorder %s42, 0
      %s45 = sadd.s32 %s44, 1
      %s46 = scalar_select %p43, %s44, %s45
      %p49 = pneg %p43
      %p50 = scmp.eq.s32.totalorder %s13, 1
      %p51 = por %p49, %p50
      %p52 = scmp.ne.s32.totalorder %s44, %s47
      %p53 = scmp.eq.s32.totalorder %s13, 0
      %p54 = por %p52, %p53
      %p55 = scmp.ne.s32.totalorder %s44, %s47
      %p56 = scmp.eq.s32.totalorder %s18, 1
      %p57 = por %p55, %p56
      %p58 = scmp.ne.s32.totalorder %s47, %s48
      %p59 = scmp.eq.s32.totalorder %s18, 0
      %p60 = por %p58, %p59
      %p61 = scmp.ne.s32.totalorder %s47, %s48
      %p62 = scmp.eq.s32.totalorder %s19, 1
      %p63 = por %p61, %p62
      %p65 = scmp.ne.s32.totalorder %s48, %s64
      %p66 = scmp.eq.s32.totalorder %s19, 0
      %p67 = por %p65, %p66
      %s69 = sadd.s32 %s68, 1
      %p72 = scmp.eq.s32.totalorder %s13, 1
      %p73 = scmp.ne.s32.totalorder %s68, %s70
      %p74 = scmp.eq.s32.totalorder %s13, 0
      %p75 = por %p73, %p74
      %p76 = scmp.ne.s32.totalorder %s68, %s70
      %p77 = scmp.eq.s32.totalorder %s18, 1
      %p78 = por %p76, %p77
      %p79 = scmp.ne.s32.totalorder %s70, %s71
      %p80 = scmp.eq.s32.totalorder %s18, 0
      %p81 = por %p79, %p80
      %p82 = scmp.ne.s32.totalorder %s70, %s71
      %p83 = scmp.eq.s32.totalorder %s19, 1
      %p84 = por %p82, %p83
      %p86 = scmp.ne.s32.totalorder %s71, %s85
      %p87 = scmp.eq.s32.totalorder %s19, 0
      %p88 = por %p86, %p87
      %s89 = ssub.s32 %s21, %s35
      %p90 = scmp.eq.s32.totalorder %s89, 0
      %s92 = sadd.s32 %s91, 1
      %s93 = scalar_select %p90, %s91, %s92
      %p96 = pneg %p90
      %p97 = scmp.eq.s32.totalorder %s13, 1
      %p98 = por %p96, %p97
      %p99 = scmp.ne.s32.totalorder %s91, %s94
      %p100 = scmp.eq.s32.totalorder %s13, 0
      %p101 = por %p99, %p100
      %p102 = scmp.ne.s32.totalorder %s91, %s94
      %p103 = scmp.eq.s32.totalorder %s18, 1
      %p104 = por %p102, %p103
      %p105 = scmp.ne.s32.totalorder %s94, %s95
      %p106 = scmp.eq.s32.totalorder %s18, 0
      %p107 = por %p105, %p106
      %p108 = scmp.ne.s32.totalorder %s94, %s95
      %p109 = scmp.eq.s32.totalorder %s19, 1
      %p110 = por %p108, %p109
      %p112 = scmp.ne.s32.totalorder %s95, %s111
      %p113 = scmp.eq.s32.totalorder %s19, 0
      %p114 = por %p112, %p113
      %s115 = ssub.s32 %s21, %s35
      %p116 = scmp.eq.s32.totalorder %s115, 0
      %s118 = sadd.s32 %s117, 1
      %s119 = scalar_select %p116, %s117, %s118
      %p122 = pneg %p116
      %p123 = scmp.eq.s32.totalorder %s13, 1
      %p124 = por %p122, %p123
      %p125 = scmp.ne.s32.totalorder %s117, %s120
      %p126 = scmp.eq.s32.totalorder %s13, 0
      %p127 = por %p125, %p126
      %p128 = scmp.ne.s32.totalorder %s117, %s120
      %p129 = scmp.eq.s32.totalorder %s18, 1
      %p130 = por %p128, %p129
      %p131 = scmp.ne.s32.totalorder %s120, %s121
      %p132 = scmp.eq.s32.totalorder %s18, 0
      %p133 = por %p131, %p132
      %p134 = scmp.ne.s32.totalorder %s120, %s121
      %p135 = scmp.eq.s32.totalorder %s19, 1
      %p136 = por %p134, %p135
      %p138 = scmp.ne.s32.totalorder %s121, %s137
      %p139 = scmp.eq.s32.totalorder %s19, 0
      %p140 = por %p138, %p139
      %s141 = ssub.s32 %s20, %s39
      %s142 = ssub.s32 %s21, %s35
      %s143 = sor.u32 %s141, %s142
      %p144 = scmp.eq.s32.totalorder %s143, 0
      %s146 = sadd.s32 %s145, 1
      %s147 = scalar_select %p144, %s145, %s146
      %p150 = pneg %p144
      %p151 = scmp.eq.s32.totalorder %s13, 1
      %p152 = por %p150, %p151
      %p153 = scmp.ne.s32.totalorder %s145, %s148
      %p154 = scmp.eq.s32.totalorder %s13, 0
      %p155 = por %p153, %p154
      %p156 = scmp.ne.s32.totalorder %s145, %s148
      %p157 = scmp.eq.s32.totalorder %s18, 1
      %p158 = por %p156, %p157
      %p159 = scmp.ne.s32.totalorder %s148, %s149
      %p160 = scmp.eq.s32.totalorder %s18, 0
      %p161 = por %p159, %p160
      %p162 = scmp.ne.s32.totalorder %s148, %s149
      %p163 = scmp.eq.s32.totalorder %s19, 1
      %p164 = por %p162, %p163
      %p166 = scmp.ne.s32.totalorder %s149, %s165
      %p167 = scmp.eq.s32.totalorder %s19, 0
      %p168 = por %p166, %p167
      %p169 = scmp.le.s32.totalorder 1, %s13
      %p170 = scmp.lt.s32.totalorder %s13, 3
      %p171 = pnand %p169, %p170
      %p172 = pneg %p171
      // Predicated region
      $region9: #{encoder_forward.2} parent=5 // pred_check
        _
      $region10: #{encoder_forward.2} parent=5 // pred_check_branch
        %174 = sbr.rel (%p171) target = $region12
      $region11: #{encoder_forward.2} parent=5 // pred_region
        %s175 = ssub.s32 %s13, 1
        // Predicated region
        $region13: #{encoder_forward.2} parent=11 // pred_check
          %p176 = pneg %p81
        $region14: #{encoder_forward.2} parent=11 // pred_check_branch
          %178 = sbr.rel (%p176) target = $region16
        $region15: #{encoder_forward.2} parent=11 // pred_region
          _
        $region16: #{encoder_forward.2} parent=11 // pred_fallthru
          _
        // Predicated region
        $region17: #{encoder_forward.2} parent=11 // pred_check
          %p179 = pneg %p107
        $region18: #{encoder_forward.2} parent=11 // pred_check_branch
          %181 = sbr.rel (%p179) target = $region20
        $region19: #{encoder_forward.2} parent=11 // pred_region
          %p182 = scmp.lt.s32.totalorder %s24, 0
          %s183 = scalar_select %p182, %s24, 0
          %s184 = smul.addr %s183, 4
          %s185 = scalar_lea.vmem %s2, %s184
        $region20: #{encoder_forward.2} parent=11 // pred_fallthru
          _
        // Predicated region
        $region21: #{encoder_forward.2} parent=11 // pred_check
          %p186 = pneg %p133
        $region22: #{encoder_forward.2} parent=11 // pred_check_branch
          %188 = sbr.rel (%p186) target = $region24
        $region23: #{encoder_forward.2} parent=11 // pred_region
          %p189 = scmp.lt.s32.totalorder %s24, 0
          %s190 = scalar_select %p189, %s24, 0
          %s191 = scalar_lea.vmem %s3, %s190
        $region24: #{encoder_forward.2} parent=11 // pred_fallthru
          _
      $region12: #{encoder_forward.2} parent=5 // pred_fallthru
        _
      %p192 = scmp.lt.s32.totalorder %s13, 2
      // Predicated region
      $region25: #{encoder_forward.2} parent=5 // pred_check
        %p193 = pneg %p192
      $region26: #{encoder_forward.2} parent=5 // pred_check_branch
        %195 = sbr.rel (%p193) target = $region28
      $region27: #{encoder_forward.2} parent=5 // pred_region
        // Predicated region
        $region29: #{encoder_forward.2} parent=27 // pred_check
          %p196 = pneg %p54
        $region30: #{encoder_forward.2} parent=27 // pred_check_branch
          %198 = sbr.rel (%p196) target = $region32
        $region31: #{encoder_forward.2} parent=27 // pred_region
          %s199 = sand.u32 %s44, 1
          %s200 = scalar_lea.sflag [#allocation4], %s199
          %s201 = sand.u32 %s44, 1
          %s202 = smul.addr %s201, 128
          %s203 = scalar_lea.vmem [#allocation3], %s202
          %s204 = smul.u32 16, %s20
          %s205 = smul.u32 2, %s22
          %207 = vsyncadd %s200, 0
          %s208 = smul.addr %s204, 2
          %s209 = sadd.s32 %s205, %s208
          %s210 = smul.addr %s209, 4
          %s211 = scalar_lea.hbm %s0, %s210
          %s212 = sshll.u32 %s211, 4
          %s213 = int_to_ptr.hbm [resolvable:$true] %s212
          %s214 = sshll.u32 %s203, 4
          %s215 = int_to_ptr.vmem [resolvable:$true] %s214
          %220 = dma.hbm_to_vmem [thread:$0]  %s213, 2048, %s215, %s200, 128, 128, 8
        $region32: #{encoder_forward.2} parent=27 // pred_fallthru
          _
      $region28: #{encoder_forward.2} parent=5 // pred_fallthru
        _
      %p221 = scmp.le.s32.totalorder 1, %s13
      %p222 = scmp.lt.s32.totalorder %s13, 3
      %p223 = pnand %p221, %p222
      %p224 = pneg %p223
      // Predicated region
      $region33: #{encoder_forward.2} parent=5 // pred_check
        _
      $region34: #{encoder_forward.2} parent=5 // pred_check_branch
        %226 = sbr.rel (%p223) target = $region36
      $region35: #{encoder_forward.2} parent=5 // pred_region
        %s227 = ssub.s32 %s13, 1
        %s228 = sand.u32 %s47, 1
        %s229 = scalar_lea.sflag [#allocation4], %s228
        %s230 = sand.u32 %s47, 1
        %s231 = smul.addr %s230, 128
        %s232 = scalar_lea.vmem [#allocation3], %s231
        // Predicated region
        $region37: #{encoder_forward.2} parent=35 // pred_check
          %p233 = pneg %p60
        $region38: #{encoder_forward.2} parent=35 // pred_check_branch
          %235 = sbr.rel (%p233) target = $region40
        $region39: #{encoder_forward.2} parent=35 // pred_region
          %237 = dma.done %s229, 2048
        $region40: #{encoder_forward.2} parent=35 // pred_fallthru
          _
        %s238 = sand.u32 %s47, 1
        %s239 = scalar_lea.sflag [#allocation4], %s238
        %s240 = sand.u32 %s47, 1
        %s241 = smul.addr %s240, 128
        %s242 = scalar_lea.vmem [#allocation3], %s241
        %p243 = pneg %p60
        %p244 = pneg %p57
        %p245 = pneg %p81
        %p246 = pneg %p78
        %p247 = scmp.lt.s32.totalorder %s24, 0
        %s248 = scalar_select %p247, %s24, 0
        %s249 = smul.addr %s248, 4
        %s250 = scalar_lea.vmem %s2, %s249
        %p251 = pneg %p107
        %p252 = pneg %p104
        %p253 = scmp.lt.s32.totalorder %s24, 0
        %s254 = scalar_select %p253, %s24, 0
        %s255 = scalar_lea.vmem %s3, %s254
        %p256 = pneg %p133
        %p257 = pneg %p130
        %p258 = pneg %p161
        %p259 = pneg %p158
        %s260 = smul.u32 16, %s23
        %p261 = scmp.lt.s32.totalorder %s260, 31
        %s262 = scalar_select %p261, %s260, 31
        %p263 = scmp.lt.s32.totalorder %s24, 0
        %s264 = scalar_select %p263, %s24, 0
        %s265 = sadd.s32 %s264, %s262
        %s266 = smul.addr %s265, 4
        %s267 = scalar_lea.vmem %s4, %s266
        %s268 = smul.u32 16, %s23
        %s269 = smul.u32 2, %s25
        %p270 = scmp.lt.s32.totalorder %s24, 0
        %s271 = scalar_select %p270, %s24, 0
        %s272 = smul.addr %s271, 4
        %s273 = scalar_lea.vmem %s2, %s272
        %p274 = scmp.lt.s32.totalorder %s24, 0
        %s275 = scalar_select %p274, %s24, 0
        %s276 = scalar_lea.vmem %s3, %s275
        %s277 = smul.u32 16, %s23
        %p278 = scmp.lt.s32.totalorder %s277, 31
        %s279 = scalar_select %p278, %s277, 31
        %p280 = scmp.lt.s32.totalorder %s24, 0
        %s281 = scalar_select %p280, %s24, 0
        %s282 = sadd.s32 %s281, %s279
        %s283 = smul.addr %s282, 4
        %s284 = scalar_lea.vmem %s4, %s283
        %s285 = smul.u32 16, %s23
        %p286 = scmp.eq.s32.totalorder %s25, 0
        // Predicated region
        $region41: #{encoder_forward.2} parent=35 // pred_check
          %p287 = pneg %p286
        $region42: #{encoder_forward.2} parent=35 // pred_check_branch
          %289 = sbr.rel (%p287) target = $region44
        $region43: #{encoder_forward.2} parent=35 // pred_region
          %290 = vst [vmem:[#allocation2] sm:$0xff] 0.0
          %291 = vst [vmem:[#allocation2 + $0x8] sm:$0xff] 0.0
          %292 = vst [vmem:[#allocation2 + $0x10] sm:$0xff] 0.0
          %293 = vst [vmem:[#allocation2 + $0x18] sm:$0xff] 0.0
          %294 = vst [vmem:[#allocation2 + $0x20] sm:$0xff] 0.0
          %295 = vst [vmem:[#allocation2 + $0x28] sm:$0xff] 0.0
          %296 = vst [vmem:[#allocation2 + $0x30] sm:$0xff] 0.0
          %297 = vst [vmem:[#allocation2 + $0x38] sm:$0xff] 0.0
          %298 = vst [vmem:[#allocation2 + $0x40] sm:$0xff] 0.0
          %299 = vst [vmem:[#allocation2 + $0x48] sm:$0xff] 0.0
          %300 = vst [vmem:[#allocation2 + $0x50] sm:$0xff] 0.0
          %301 = vst [vmem:[#allocation2 + $0x58] sm:$0xff] 0.0
          %302 = vst [vmem:[#allocation2 + $0x60] sm:$0xff] 0.0
          %303 = vst [vmem:[#allocation2 + $0x68] sm:$0xff] 0.0
          %304 = vst [vmem:[#allocation2 + $0x70] sm:$0xff] 0.0
          %305 = vst [vmem:[#allocation2 + $0x78] sm:$0xff] 0.0
        $region44: #{encoder_forward.2} parent=35 // pred_fallthru
          _
        %s306 = smul.u32 %s25, 256
        %s307 = sshra.s32 %s306, 3
        %s308 = sand.u32 %s306, 7
        %s309 = smul.addr %s307, 4
        %s310 = scalar_lea.vmem %s1, %s309
        %v311 = vld [vmem:[%s310] sm:$0xf]
        %v312 = vld [vmem:[%s310 + $0x4] sm:$0xf]
        %v313 = vld [vmem:[%s310 + $0x8] sm:$0xf]
        %v314 = vld [vmem:[%s310 + $0xc] sm:$0xf]
        %v315 = vld [vmem:[%s310 + $0x10] sm:$0xf]
        %v316 = vld [vmem:[%s310 + $0x14] sm:$0xf]
        %v317 = vld [vmem:[%s310 + $0x18] sm:$0xf]
        %v318 = vld [vmem:[%s310 + $0x1c] sm:$0xf]
        %v319 = vld [vmem:[%s310 + $0x20] sm:$0xf]
        %v320 = vld [vmem:[%s310 + $0x24] sm:$0xf]
        %v321 = vld [vmem:[%s310 + $0x28] sm:$0xf]
        %v322 = vld [vmem:[%s310 + $0x2c] sm:$0xf]
        %v323 = vld [vmem:[%s310 + $0x30] sm:$0xf]
        %v324 = vld [vmem:[%s310 + $0x34] sm:$0xf]
        %v325 = vld [vmem:[%s310 + $0x38] sm:$0xf]
        %v326 = vld [vmem:[%s310 + $0x3c] sm:$0xf]
        %v327 = vld [vmem:[%s310 + $0x40] sm:$0xf]
        %v328 = vld [vmem:[%s310 + $0x44] sm:$0xf]
        %v329 = vld [vmem:[%s310 + $0x48] sm:$0xf]
        %v330 = vld [vmem:[%s310 + $0x4c] sm:$0xf]
        %v331 = vld [vmem:[%s310 + $0x50] sm:$0xf]
        %v332 = vld [vmem:[%s310 + $0x54] sm:$0xf]
        %v333 = vld [vmem:[%s310 + $0x58] sm:$0xf]
        %v334 = vld [vmem:[%s310 + $0x5c] sm:$0xf]
        %v335 = vld [vmem:[%s310 + $0x60] sm:$0xf]
        %v336 = vld [vmem:[%s310 + $0x64] sm:$0xf]
        %v337 = vld [vmem:[%s310 + $0x68] sm:$0xf]
        %v338 = vld [vmem:[%s310 + $0x6c] sm:$0xf]
        %v339 = vld [vmem:[%s310 + $0x70] sm:$0xf]
        %v340 = vld [vmem:[%s310 + $0x74] sm:$0xf]
        %v341 = vld [vmem:[%s310 + $0x78] sm:$0xf]
        %v342 = vld [vmem:[%s310 + $0x7c] sm:$0xf]
        %v343 = vld [vmem:[%s273] sm:$0xf]
        %v344 = vld [vmem:[%s273 + $0x4] sm:$0xf]
        %v345 = vld [vmem:[%s273 + $0x8] sm:$0xf]
        %v346 = vld [vmem:[%s273 + $0xc] sm:$0xf]
        %v347 = vld [vmem:[%s273 + $0x10] sm:$0xf]
        %v348 = vld [vmem:[%s273 + $0x14] sm:$0xf]
        %v349 = vld [vmem:[%s273 + $0x18] sm:$0xf]
        %v350 = vld [vmem:[%s273 + $0x1c] sm:$0xf]
        %v351 = vld [vmem:[%s273 + $0x20] sm:$0xf]
        %v352 = vld [vmem:[%s273 + $0x24] sm:$0xf]
        %v353 = vld [vmem:[%s273 + $0x28] sm:$0xf]
        %v354 = vld [vmem:[%s273 + $0x2c] sm:$0xf]
        %v355 = vld [vmem:[%s273 + $0x30] sm:$0xf]
        %v356 = vld [vmem:[%s273 + $0x34] sm:$0xf]
        %v357 = vld [vmem:[%s273 + $0x38] sm:$0xf]
        %v358 = vld [vmem:[%s273 + $0x3c] sm:$0xf]
        %v391 = vunpack.c.l.b16 %v311
        %v392 = vunpack.c.l.b16 %v312
        %v393 = vunpack.c.l.b16 %v313
        %v394 = vunpack.c.l.b16 %v314
        %v395 = vunpack.c.l.b16 %v315
        %v396 = vunpack.c.l.b16 %v316
        %v397 = vunpack.c.l.b16 %v317
        %v398 = vunpack.c.l.b16 %v318
        %v399 = vunpack.c.l.b16 %v319
        %v400 = vunpack.c.l.b16 %v320
        %v401 = vunpack.c.l.b16 %v321
        %v402 = vunpack.c.l.b16 %v322
        %v403 = vunpack.c.l.b16 %v323
        %v404 = vunpack.c.l.b16 %v324
        %v405 = vunpack.c.l.b16 %v325
        %v406 = vunpack.c.l.b16 %v326
        %v407 = vunpack.c.l.b16 %v327
        %v408 = vunpack.c.l.b16 %v328
        %v409 = vunpack.c.l.b16 %v329
        %v410 = vunpack.c.l.b16 %v330
        %v411 = vunpack.c.l.b16 %v331
        %v412 = vunpack.c.l.b16 %v332
        %v413 = vunpack.c.l.b16 %v333
        %v414 = vunpack.c.l.b16 %v334
        %v415 = vunpack.c.l.b16 %v335
        %v416 = vunpack.c.l.b16 %v336
        %v417 = vunpack.c.l.b16 %v337
        %v418 = vunpack.c.l.b16 %v338
        %v419 = vunpack.c.l.b16 %v339
        %v420 = vunpack.c.l.b16 %v340
        %v421 = vunpack.c.l.b16 %v341
        %v422 = vunpack.c.l.b16 %v342
        %v423 = vpack.c.b16 %v392, %v391
        %v424 = vpack.c.b16 %v394, %v393
        %v425 = vpack.c.b16 %v396, %v395
        %v426 = vpack.c.b16 %v398, %v397
        %v427 = vpack.c.b16 %v400, %v399
        %v428 = vpack.c.b16 %v402, %v401
        %v429 = vpack.c.b16 %v404, %v403
        %v430 = vpack.c.b16 %v406, %v405
        %v431 = vpack.c.b16 %v408, %v407
        %v432 = vpack.c.b16 %v410, %v409
        %v433 = vpack.c.b16 %v412, %v411
        %v434 = vpack.c.b16 %v414, %v413
        %v435 = vpack.c.b16 %v416, %v415
        %v436 = vpack.c.b16 %v418, %v417
        %v437 = vpack.c.b16 %v420, %v419
        %v438 = vpack.c.b16 %v422, %v421
        %v471 = vunpack.c.l.b16 %v343
        %v472 = vunpack.c.l.b16 %v344
        %v473 = vunpack.c.l.b16 %v345
        %v474 = vunpack.c.l.b16 %v346
        %v475 = vunpack.c.l.b16 %v347
        %v476 = vunpack.c.l.b16 %v348
        %v477 = vunpack.c.l.b16 %v349
        %v478 = vunpack.c.l.b16 %v350
        %v479 = vunpack.c.l.b16 %v351
        %v480 = vunpack.c.l.b16 %v352
        %v481 = vunpack.c.l.b16 %v353
        %v482 = vunpack.c.l.b16 %v354
        %v483 = vunpack.c.l.b16 %v355
        %v484 = vunpack.c.l.b16 %v356
        %v485 = vunpack.c.l.b16 %v357
        %v486 = vunpack.c.l.b16 %v358
        %v487 = vpack.c.b16 %v472, %v471
        %v488 = vpack.c.b16 %v474, %v473
        %v489 = vpack.c.b16 %v476, %v475
        %v490 = vpack.c.b16 %v478, %v477
        %v491 = vpack.c.b16 %v480, %v479
        %v492 = vpack.c.b16 %v482, %v481
        %v493 = vpack.c.b16 %v484, %v483
        %v494 = vpack.c.b16 %v486, %v485
        %503 = vmatpush.bf16.msra.mxu0 %v494
        %504 = vmatpush.bf16.msra.mxu0 %v493
        %505 = vmatpush.bf16.msra.mxu0 %v492
        %506 = vmatpush.bf16.msra.mxu0 %v491
        %507 = vmatpush.bf16.msra.mxu0 %v490
        %508 = vmatpush.bf16.msra.mxu0 %v489
        %509 = vmatpush.bf16.msra.mxu0 %v488
        %510 = vmatpush.bf16.msra.mxu0 %v487
        %511 = vmatmul.bf16.gmra.mxu0 %v423
        %v512 = vpop.f32.mrf.mxu0
        %v513 = vadd.f32 0.0, %v512
        %v514 = vpop.f32.mrf.mxu0
        %v515 = vadd.f32 0.0, %v514
        %516 = vmatmul.bf16.gmra.mxu0 %v424
        %v517 = vpop.f32.mrf.mxu0
        %v518 = vadd.f32 0.0, %v517
        %v519 = vpop.f32.mrf.mxu0
        %v520 = vadd.f32 0.0, %v519
        %521 = vmatmul.bf16.gmra.mxu0 %v425
        %v522 = vpop.f32.mrf.mxu0
        %v523 = vadd.f32 0.0, %v522
        %v524 = vpop.f32.mrf.mxu0
        %v525 = vadd.f32 0.0, %v524
        %526 = vmatmul.bf16.gmra.mxu0 %v426
        %v527 = vpop.f32.mrf.mxu0
        %v528 = vadd.f32 0.0, %v527
        %v529 = vpop.f32.mrf.mxu0
        %v530 = vadd.f32 0.0, %v529
        %531 = vmatmul.bf16.gmra.mxu0 %v427
        %v532 = vpop.f32.mrf.mxu0
        %v533 = vadd.f32 0.0, %v532
        %v534 = vpop.f32.mrf.mxu0
        %v535 = vadd.f32 0.0, %v534
        %536 = vmatmul.bf16.gmra.mxu0 %v428
        %v537 = vpop.f32.mrf.mxu0
        %v538 = vadd.f32 0.0, %v537
        %v539 = vpop.f32.mrf.mxu0
        %v540 = vadd.f32 0.0, %v539
        %541 = vmatmul.bf16.gmra.mxu0 %v429
        %v542 = vpop.f32.mrf.mxu0
        %v543 = vadd.f32 0.0, %v542
        %v544 = vpop.f32.mrf.mxu0
        %v545 = vadd.f32 0.0, %v544
        %546 = vmatmul.bf16.gmra.mxu0 %v430
        %v547 = vpop.f32.mrf.mxu0
        %v548 = vadd.f32 0.0, %v547
        %v549 = vpop.f32.mrf.mxu0
        %v550 = vadd.f32 0.0, %v549
        %551 = vmatmul.bf16.gmra.mxu0 %v431
        %v552 = vpop.f32.mrf.mxu0
        %v553 = vadd.f32 0.0, %v552
        %v554 = vpop.f32.mrf.mxu0
        %v555 = vadd.f32 0.0, %v554
        %556 = vmatmul.bf16.gmra.mxu0 %v432
        %v557 = vpop.f32.mrf.mxu0
        %v558 = vadd.f32 0.0, %v557
        %v559 = vpop.f32.mrf.mxu0
        %v560 = vadd.f32 0.0, %v559
        %561 = vmatmul.bf16.gmra.mxu0 %v433
        %v562 = vpop.f32.mrf.mxu0
        %v563 = vadd.f32 0.0, %v562
        %v564 = vpop.f32.mrf.mxu0
        %v565 = vadd.f32 0.0, %v564
        %566 = vmatmul.bf16.gmra.mxu0 %v434
        %v567 = vpop.f32.mrf.mxu0
        %v568 = vadd.f32 0.0, %v567
        %v569 = vpop.f32.mrf.mxu0
        %v570 = vadd.f32 0.0, %v569
        %571 = vmatmul.bf16.gmra.mxu0 %v435
        %v572 = vpop.f32.mrf.mxu0
        %v573 = vadd.f32 0.0, %v572
        %v574 = vpop.f32.mrf.mxu0
        %v575 = vadd.f32 0.0, %v574
        %576 = vmatmul.bf16.gmra.mxu0 %v436
        %v577 = vpop.f32.mrf.mxu0
        %v578 = vadd.f32 0.0, %v577
        %v579 = vpop.f32.mrf.mxu0
        %v580 = vadd.f32 0.0, %v579
        %581 = vmatmul.bf16.gmra.mxu0 %v437
        %v582 = vpop.f32.mrf.mxu0
        %v583 = vadd.f32 0.0, %v582
        %v584 = vpop.f32.mrf.mxu0
        %v585 = vadd.f32 0.0, %v584
        %586 = vmatmul.bf16.gmra.mxu0 %v438
        %v587 = vpop.f32.mrf.mxu0
        %v588 = vadd.f32 0.0, %v587
        %v589 = vpop.f32.mrf.mxu0
        %v590 = vadd.f32 0.0, %v589
        %591 = vdwg.mxu0
        %v592 = vpack.c.bf16 %v515, %v513
        %v593 = vpack.c.bf16 %v520, %v518
        %v594 = vpack.c.bf16 %v525, %v523
        %v595 = vpack.c.bf16 %v530, %v528
        %v596 = vpack.c.bf16 %v535, %v533
        %v597 = vpack.c.bf16 %v540, %v538
        %v598 = vpack.c.bf16 %v545, %v543
        %v599 = vpack.c.bf16 %v550, %v548
        %v600 = vpack.c.bf16 %v555, %v553
        %v601 = vpack.c.bf16 %v560, %v558
        %v602 = vpack.c.bf16 %v565, %v563
        %v603 = vpack.c.bf16 %v570, %v568
        %v604 = vpack.c.bf16 %v575, %v573
        %v605 = vpack.c.bf16 %v580, %v578
        %v606 = vpack.c.bf16 %v585, %v583
        %v607 = vpack.c.bf16 %v590, %v588
        %v608 = vld [vmem:[#allocation2] sm:$0xff]
        %v609 = vld [vmem:[#allocation2 + $0x8] sm:$0xff]
        %v610 = vld [vmem:[#allocation2 + $0x10] sm:$0xff]
        %v611 = vld [vmem:[#allocation2 + $0x18] sm:$0xff]
        %v612 = vld [vmem:[#allocation2 + $0x20] sm:$0xff]
        %v613 = vld [vmem:[#allocation2 + $0x28] sm:$0xff]
        %v614 = vld [vmem:[#allocation2 + $0x30] sm:$0xff]
        %v615 = vld [vmem:[#allocation2 + $0x38] sm:$0xff]
        %v616 = vld [vmem:[#allocation2 + $0x40] sm:$0xff]
        %v617 = vld [vmem:[#allocation2 + $0x48] sm:$0xff]
        %v618 = vld [vmem:[#allocation2 + $0x50] sm:$0xff]
        %v619 = vld [vmem:[#allocation2 + $0x58] sm:$0xff]
        %v620 = vld [vmem:[#allocation2 + $0x60] sm:$0xff]
        %v621 = vld [vmem:[#allocation2 + $0x68] sm:$0xff]
        %v622 = vld [vmem:[#allocation2 + $0x70] sm:$0xff]
        %v623 = vld [vmem:[#allocation2 + $0x78] sm:$0xff]
        %v624 = vld [vmem:[%s232] sm:$0xff]
        %v625 = vld [vmem:[%s232 + $0x8] sm:$0xff]
        %v626 = vld [vmem:[%s232 + $0x10] sm:$0xff]
        %v627 = vld [vmem:[%s232 + $0x18] sm:$0xff]
        %v628 = vld [vmem:[%s232 + $0x20] sm:$0xff]
        %v629 = vld [vmem:[%s232 + $0x28] sm:$0xff]
        %v630 = vld [vmem:[%s232 + $0x30] sm:$0xff]
        %v631 = vld [vmem:[%s232 + $0x38] sm:$0xff]
        %v632 = vld [vmem:[%s232 + $0x40] sm:$0xff]
        %v633 = vld [vmem:[%s232 + $0x48] sm:$0xff]
        %v634 = vld [vmem:[%s232 + $0x50] sm:$0xff]
        %v635 = vld [vmem:[%s232 + $0x58] sm:$0xff]
        %v636 = vld [vmem:[%s232 + $0x60] sm:$0xff]
        %v637 = vld [vmem:[%s232 + $0x68] sm:$0xff]
        %v638 = vld [vmem:[%s232 + $0x70] sm:$0xff]
        %v639 = vld [vmem:[%s232 + $0x78] sm:$0xff]
        %v656 = vunpack.c.l.b16 %v624
        %v657 = vunpack.c.h.b16 %v624
        %v658 = vunpack.c.l.b16 %v625
        %v659 = vunpack.c.h.b16 %v625
        %v660 = vunpack.c.l.b16 %v626
        %v661 = vunpack.c.h.b16 %v626
        %v662 = vunpack.c.l.b16 %v627
        %v663 = vunpack.c.h.b16 %v627
        %v664 = vunpack.c.l.b16 %v628
        %v665 = vunpack.c.h.b16 %v628
        %v666 = vunpack.c.l.b16 %v629
        %v667 = vunpack.c.h.b16 %v629
        %v668 = vunpack.c.l.b16 %v630
        %v669 = vunpack.c.h.b16 %v630
        %v670 = vunpack.c.l.b16 %v631
        %v671 = vunpack.c.h.b16 %v631
        %v672 = vunpack.c.l.b16 %v632
        %v673 = vunpack.c.h.b16 %v632
        %v674 = vunpack.c.l.b16 %v633
        %v675 = vunpack.c.h.b16 %v633
        %v676 = vunpack.c.l.b16 %v634
        %v677 = vunpack.c.h.b16 %v634
        %v678 = vunpack.c.l.b16 %v635
        %v679 = vunpack.c.h.b16 %v635
        %v680 = vunpack.c.l.b16 %v636
        %v681 = vunpack.c.h.b16 %v636
        %v682 = vunpack.c.l.b16 %v637
        %v683 = vunpack.c.h.b16 %v637
        %v684 = vunpack.c.l.b16 %v638
        %v685 = vunpack.c.h.b16 %v638
        %v686 = vunpack.c.l.b16 %v639
        %v687 = vunpack.c.h.b16 %v639
        %v688 = vpack.c.b16 %v658, %v656
        %v689 = vpack.c.b16 %v659, %v657
        %v690 = vpack.c.b16 %v662, %v660
        %v691 = vpack.c.b16 %v663, %v661
        %v692 = vpack.c.b16 %v666, %v664
        %v693 = vpack.c.b16 %v667, %v665
        %v694 = vpack.c.b16 %v670, %v668
        %v695 = vpack.c.b16 %v671, %v669
        %v696 = vpack.c.b16 %v674, %v672
        %v697 = vpack.c.b16 %v675, %v673
        %v698 = vpack.c.b16 %v678, %v676
        %v699 = vpack.c.b16 %v679, %v677
        %v700 = vpack.c.b16 %v682, %v680
        %v701 = vpack.c.b16 %v683, %v681
        %v702 = vpack.c.b16 %v686, %v684
        %v703 = vpack.c.b16 %v687, %v685
        %720 = vmatpush.bf16.msra.mxu0 %v599
        %721 = vmatpush.bf16.msra.mxu0 %v598
        %722 = vmatpush.bf16.msra.mxu0 %v597
        %723 = vmatpush.bf16.msra.mxu0 %v596
        %724 = vmatpush.bf16.msra.mxu0 %v595
        %725 = vmatpush.bf16.msra.mxu0 %v594
        %726 = vmatpush.bf16.msra.mxu0 %v593
        %727 = vmatpush.bf16.msra.mxu0 %v592
        %728 = vmatmul.bf16.gmra.mxu0 %v688
        %v729 = vpop.f32.mrf.mxu0
        %v730 = vadd.f32 0.0, %v729
        %v731 = vpop.f32.mrf.mxu0
        %v732 = vadd.f32 0.0, %v731
        %733 = vmatmul.bf16.gmra.mxu0 %v690
        %v734 = vpop.f32.mrf.mxu0
        %v735 = vadd.f32 0.0, %v734
        %v736 = vpop.f32.mrf.mxu0
        %v737 = vadd.f32 0.0, %v736
        %738 = vmatmul.bf16.gmra.mxu0 %v692
        %v739 = vpop.f32.mrf.mxu0
        %v740 = vadd.f32 0.0, %v739
        %v741 = vpop.f32.mrf.mxu0
        %v742 = vadd.f32 0.0, %v741
        %743 = vmatmul.bf16.gmra.mxu0 %v694
        %v744 = vpop.f32.mrf.mxu0
        %v745 = vadd.f32 0.0, %v744
        %v746 = vpop.f32.mrf.mxu0
        %v747 = vadd.f32 0.0, %v746
        %748 = vmatmul.bf16.gmra.mxu0 %v696
        %v749 = vpop.f32.mrf.mxu0
        %v750 = vadd.f32 0.0, %v749
        %v751 = vpop.f32.mrf.mxu0
        %v752 = vadd.f32 0.0, %v751
        %753 = vmatmul.bf16.gmra.mxu0 %v698
        %v754 = vpop.f32.mrf.mxu0
        %v755 = vadd.f32 0.0, %v754
        %v756 = vpop.f32.mrf.mxu0
        %v757 = vadd.f32 0.0, %v756
        %758 = vmatmul.bf16.gmra.mxu0 %v700
        %v759 = vpop.f32.mrf.mxu0
        %v760 = vadd.f32 0.0, %v759
        %v761 = vpop.f32.mrf.mxu0
        %v762 = vadd.f32 0.0, %v761
        %763 = vmatmul.bf16.gmra.mxu0 %v702
        %v764 = vpop.f32.mrf.mxu0
        %v765 = vadd.f32 0.0, %v764
        %v766 = vpop.f32.mrf.mxu0
        %v767 = vadd.f32 0.0, %v766
        %768 = vdwg.mxu0
        %769 = vmatpush.bf16.msra.mxu0 %v607
        %770 = vmatpush.bf16.msra.mxu0 %v606
        %771 = vmatpush.bf16.msra.mxu0 %v605
        %772 = vmatpush.bf16.msra.mxu0 %v604
        %773 = vmatpush.bf16.msra.mxu0 %v603
        %774 = vmatpush.bf16.msra.mxu0 %v602
        %775 = vmatpush.bf16.msra.mxu0 %v601
        %776 = vmatpush.bf16.msra.mxu0 %v600
        %777 = vmatmul.bf16.gmra.mxu0 %v689
        %v778 = vpop.f32.mrf.mxu0
        %v779 = vadd.f32 %v730, %v778
        %v780 = vpop.f32.mrf.mxu0
        %v781 = vadd.f32 %v732, %v780
        %782 = vmatmul.bf16.gmra.mxu0 %v691
        %v783 = vpop.f32.mrf.mxu0
        %v784 = vadd.f32 %v735, %v783
        %v785 = vpop.f32.mrf.mxu0
        %v786 = vadd.f32 %v737, %v785
        %787 = vmatmul.bf16.gmra.mxu0 %v693
        %v788 = vpop.f32.mrf.mxu0
        %v789 = vadd.f32 %v740, %v788
        %v790 = vpop.f32.mrf.mxu0
        %v791 = vadd.f32 %v742, %v790
        %792 = vmatmul.bf16.gmra.mxu0 %v695
        %v793 = vpop.f32.mrf.mxu0
        %v794 = vadd.f32 %v745, %v793
        %v795 = vpop.f32.mrf.mxu0
        %v796 = vadd.f32 %v747, %v795
        %797 = vmatmul.bf16.gmra.mxu0 %v697
        %v798 = vpop.f32.mrf.mxu0
        %v799 = vadd.f32 %v750, %v798
        %v800 = vpop.f32.mrf.mxu0
        %v801 = vadd.f32 %v752, %v800
        %802 = vmatmul.bf16.gmra.mxu0 %v699
        %v803 = vpop.f32.mrf.mxu0
        %v804 = vadd.f32 %v755, %v803
        %v805 = vpop.f32.mrf.mxu0
        %v806 = vadd.f32 %v757, %v805
        %807 = vmatmul.bf16.gmra.mxu0 %v701
        %v808 = vpop.f32.mrf.mxu0
        %v809 = vadd.f32 %v760, %v808
        %v810 = vpop.f32.mrf.mxu0
        %v811 = vadd.f32 %v762, %v810
        %812 = vmatmul.bf16.gmra.mxu0 %v703
        %v813 = vpop.f32.mrf.mxu0
        %v814 = vadd.f32 %v765, %v813
        %v815 = vpop.f32.mrf.mxu0
        %v816 = vadd.f32 %v767, %v815
        %817 = vdwg.mxu0
        %v818 = vadd.f32 %v608, %v779
        %v819 = vadd.f32 %v609, %v781
        %v820 = vadd.f32 %v610, %v784
        %v821 = vadd.f32 %v611, %v786
        %v822 = vadd.f32 %v612, %v789
        %v823 = vadd.f32 %v613, %v791
        %v824 = vadd.f32 %v614, %v794
        %v825 = vadd.f32 %v615, %v796
        %v826 = vadd.f32 %v616, %v799
        %v827 = vadd.f32 %v617, %v801
        %v828 = vadd.f32 %v618, %v804
        %v829 = vadd.f32 %v619, %v806
        %v830 = vadd.f32 %v620, %v809
        %v831 = vadd.f32 %v621, %v811
        %v832 = vadd.f32 %v622, %v814
        %v833 = vadd.f32 %v623, %v816
        %834 = vst [vmem:[#allocation2] sm:$0xff] %v818
        %835 = vst [vmem:[#allocation2 + $0x8] sm:$0xff] %v819
        %836 = vst [vmem:[#allocation2 + $0x10] sm:$0xff] %v820
        %837 = vst [vmem:[#allocation2 + $0x18] sm:$0xff] %v821
        %838 = vst [vmem:[#allocation2 + $0x20] sm:$0xff] %v822
        %839 = vst [vmem:[#allocation2 + $0x28] sm:$0xff] %v823
        %840 = vst [vmem:[#allocation2 + $0x30] sm:$0xff] %v824
        %841 = vst [vmem:[#allocation2 + $0x38] sm:$0xff] %v825
        %842 = vst [vmem:[#allocation2 + $0x40] sm:$0xff] %v826
        %843 = vst [vmem:[#allocation2 + $0x48] sm:$0xff] %v827
        %844 = vst [vmem:[#allocation2 + $0x50] sm:$0xff] %v828
        %845 = vst [vmem:[#allocation2 + $0x58] sm:$0xff] %v829
        %846 = vst [vmem:[#allocation2 + $0x60] sm:$0xff] %v830
        %847 = vst [vmem:[#allocation2 + $0x68] sm:$0xff] %v831
        %848 = vst [vmem:[#allocation2 + $0x70] sm:$0xff] %v832
        %849 = vst [vmem:[#allocation2 + $0x78] sm:$0xff] %v833
        // Predicated region
        $region45: #{encoder_forward.2} parent=35 // pred_check
          %p850 = pneg %p286
        $region46: #{encoder_forward.2} parent=35 // pred_check_branch
          %852 = sbr.rel (%p850) target = $region48
        $region47: #{encoder_forward.2} parent=35 // pred_region
          %v853 = vld [vmem:[#allocation2] sm:$0xff]
          %v854 = vld [vmem:[#allocation2 + $0x8] sm:$0xff]
          %v855 = vld [vmem:[#allocation2 + $0x10] sm:$0xff]
          %v856 = vld [vmem:[#allocation2 + $0x18] sm:$0xff]
          %v857 = vld [vmem:[#allocation2 + $0x20] sm:$0xff]
          %v858 = vld [vmem:[#allocation2 + $0x28] sm:$0xff]
          %v859 = vld [vmem:[#allocation2 + $0x30] sm:$0xff]
          %v860 = vld [vmem:[#allocation2 + $0x38] sm:$0xff]
          %v861 = vld [vmem:[#allocation2 + $0x40] sm:$0xff]
          %v862 = vld [vmem:[#allocation2 + $0x48] sm:$0xff]
          %v863 = vld [vmem:[#allocation2 + $0x50] sm:$0xff]
          %v864 = vld [vmem:[#allocation2 + $0x58] sm:$0xff]
          %v865 = vld [vmem:[#allocation2 + $0x60] sm:$0xff]
          %v866 = vld [vmem:[#allocation2 + $0x68] sm:$0xff]
          %v867 = vld [vmem:[#allocation2 + $0x70] sm:$0xff]
          %v868 = vld [vmem:[#allocation2 + $0x78] sm:$0xff]
          %v869 = vld [vmem:[%s276] sm:$0x1]
          %v871 = vperm.slane %v869, 0
          %v873 = vadd.f32 %v853, %v871
          %v874 = vadd.f32 %v854, %v871
          %v875 = vadd.f32 %v855, %v871
          %v876 = vadd.f32 %v856, %v871
          %v877 = vadd.f32 %v857, %v871
          %v878 = vadd.f32 %v858, %v871
          %v879 = vadd.f32 %v859, %v871
          %v880 = vadd.f32 %v860, %v871
          %v881 = vadd.f32 %v861, %v871
          %v882 = vadd.f32 %v862, %v871
          %v883 = vadd.f32 %v863, %v871
          %v884 = vadd.f32 %v864, %v871
          %v885 = vadd.f32 %v865, %v871
          %v886 = vadd.f32 %v866, %v871
          %v887 = vadd.f32 %v867, %v871
          %v888 = vadd.f32 %v868, %v871
          %v889 = vmax.f32 %v873, 0.0
          %v890 = vmax.f32 %v874, 0.0
          %v891 = vmax.f32 %v875, 0.0
          %v892 = vmax.f32 %v876, 0.0
          %v893 = vmax.f32 %v877, 0.0
          %v894 = vmax.f32 %v878, 0.0
          %v895 = vmax.f32 %v879, 0.0
          %v896 = vmax.f32 %v880, 0.0
          %v897 = vmax.f32 %v881, 0.0
          %v898 = vmax.f32 %v882, 0.0
          %v899 = vmax.f32 %v883, 0.0
          %v900 = vmax.f32 %v884, 0.0
          %v901 = vmax.f32 %v885, 0.0
          %v902 = vmax.f32 %v886, 0.0
          %v903 = vmax.f32 %v887, 0.0
          %v904 = vmax.f32 %v888, 0.0
          %v905 = vpack.c.bf16 %v889, %v889
          %v906 = vpack.c.bf16 %v890, %v890
          %v907 = vpack.c.bf16 %v891, %v891
          %v908 = vpack.c.bf16 %v892, %v892
          %v909 = vpack.c.bf16 %v893, %v893
          %v910 = vpack.c.bf16 %v894, %v894
          %v911 = vpack.c.bf16 %v895, %v895
          %v912 = vpack.c.bf16 %v896, %v896
          %v913 = vpack.c.bf16 %v897, %v897
          %v914 = vpack.c.bf16 %v898, %v898
          %v915 = vpack.c.bf16 %v899, %v899
          %v916 = vpack.c.bf16 %v900, %v900
          %v917 = vpack.c.bf16 %v901, %v901
          %v918 = vpack.c.bf16 %v902, %v902
          %v919 = vpack.c.bf16 %v903, %v903
          %v920 = vpack.c.bf16 %v904, %v904
          %921 = vst [vmem:[%s284] sm:$0xf] %v905
          %922 = vst [vmem:[%s284 + $0x4] sm:$0xf] %v906
          %923 = vst [vmem:[%s284 + $0x8] sm:$0xf] %v907
          %924 = vst [vmem:[%s284 + $0xc] sm:$0xf] %v908
          %925 = vst [vmem:[%s284 + $0x10] sm:$0xf] %v909
          %926 = vst [vmem:[%s284 + $0x14] sm:$0xf] %v910
          %927 = vst [vmem:[%s284 + $0x18] sm:$0xf] %v911
          %928 = vst [vmem:[%s284 + $0x1c] sm:$0xf] %v912
          %929 = vst [vmem:[%s284 + $0x20] sm:$0xf] %v913
          %930 = vst [vmem:[%s284 + $0x24] sm:$0xf] %v914
          %931 = vst [vmem:[%s284 + $0x28] sm:$0xf] %v915
          %932 = vst [vmem:[%s284 + $0x2c] sm:$0xf] %v916
          %933 = vst [vmem:[%s284 + $0x30] sm:$0xf] %v917
          %934 = vst [vmem:[%s284 + $0x34] sm:$0xf] %v918
          %935 = vst [vmem:[%s284 + $0x38] sm:$0xf] %v919
          %936 = vst [vmem:[%s284 + $0x3c] sm:$0xf] %v920
        $region48: #{encoder_forward.2} parent=35 // pred_fallthru
          _
        %s937 = smul.u32 16, %s23
        %p938 = scmp.lt.s32.totalorder %s937, 31
        %s939 = scalar_select %p938, %s937, 31
        %p940 = scmp.lt.s32.totalorder %s24, 0
        %s941 = scalar_select %p940, %s24, 0
        %s942 = sadd.s32 %s941, %s939
        %s943 = smul.addr %s942, 4
        %s944 = scalar_lea.vmem %s4, %s943
        // Predicated region
        $region49: #{encoder_forward.2} parent=35 // pred_check
          %p945 = pneg %p158
        $region50: #{encoder_forward.2} parent=35 // pred_check_branch
          %947 = sbr.rel (%p945) target = $region52
        $region51: #{encoder_forward.2} parent=35 // pred_region
          %s948 = smul.u32 16, %s23
        $region52: #{encoder_forward.2} parent=35 // pred_fallthru
          _
      $region36: #{encoder_forward.2} parent=5 // pred_fallthru
        _
      %p949 = scmp.le.s32.totalorder 2, %s13
      // Predicated region
      $region53: #{encoder_forward.2} parent=5 // pred_check
        %p950 = pneg %p949
      $region54: #{encoder_forward.2} parent=5 // pred_check_branch
        %952 = sbr.rel (%p950) target = $region56
      $region55: #{encoder_forward.2} parent=5 // pred_region
        %s953 = ssub.s32 %s13, 2
        // Predicated region
        $region57: #{encoder_forward.2} parent=55 // pred_check
          %p954 = pneg %p164
        $region58: #{encoder_forward.2} parent=55 // pred_check_branch
          %956 = sbr.rel (%p954) target = $region60
        $region59: #{encoder_forward.2} parent=55 // pred_region
          %s957 = smul.u32 16, %s26
          %p958 = scmp.lt.s32.totalorder %s957, 31
          %s959 = scalar_select %p958, %s957, 31
          %p960 = scmp.lt.s32.totalorder %s27, 0
          %s961 = scalar_select %p960, %s27, 0
          %s962 = sadd.s32 %s961, %s959
          %s963 = smul.addr %s962, 4
          %s964 = scalar_lea.vmem %s4, %s963
        $region60: #{encoder_forward.2} parent=55 // pred_fallthru
          _
      $region56: #{encoder_forward.2} parent=5 // pred_fallthru
        _
    $region6: #{encoder_forward.2} parent=1 // loop_footer
      %s17 = sadd.s32 1, %s13
    $region7: #{encoder_forward.2} parent=1 // loop_footer_branch
      %12 = sbr.rel target = $region3
    $region8: #{encoder_forward.2} parent=1 // loop_exit
      _
    %965 = vsyncpa [#allocation4], 1
    %s966 = scalar_lea.sflag [#allocation4], 1
    %967 = vsyncpa %s966, 1

// kernel: encoder_forward.3
$region0: #{encoder_forward.3}
  #allocation0 [shape = 'u32[]', space=smem, size = 0x4, offset = 0x4, fixed_abs, tag = 'smem constant byte address 0x4 - core index']
  #allocation1 [shape = 'u32[72,128]{1,0:T(1,128)}', space=vmem, size = 0x9000, scoped, tag = 'internal scratch']
  %s0 = inlined_call_operand.vmem [shape: bf16[256,256], index: 0, kind: input, shape index: {}]
  %s1 = inlined_call_operand.vmem [shape: bf16[256,128], index: 1, kind: input, shape index: {}]
  %s2 = inlined_call_operand.vmem [shape: bf16[128,128], index: 2, kind: input, shape index: {}]
  %s3 = inlined_call_operand.vmem [shape: f32[1,128], index: 3, kind: input, shape index: {}]
  %s4 = inlined_call_operand.vmem [shape: f32[256,128], index: 4, kind: output, shape index: {}]
  %s5 = sld [smem:[#allocation0]]
  $region57: #{encoder_forward.3} parent=0
    _
  %s7 = ssub.s32 1, %s5
  %s8 = scalar_select 0, %s7, %s5
  loop: start=0, step=1, limit=4
  $region2: #{encoder_forward.3} parent=0 // loop_pre_header
    _
  $region3: #{encoder_forward.3} parent=0 // loop_header
    %s10 = sphi 0, %s14
    %p11 = scmp.ge.s32.totalorder %s10, 4
    %s17 = sphi 0, %s36
    %s18 = sphi 0, %s32
    %s19 = sphi 0, %s28
    %s20 = sphi 0, %s17
    %s21 = sphi 0, %s18
    %s22 = sphi 0, %s19
    %s23 = sphi 0, %s20
    %s24 = sphi 0, %s21
    %s25 = sphi 0, %s22
    %s41 = sphi 0, %s43
    %s44 = sphi 0, %s41
    %s45 = sphi 0, %s44
    %s61 = sphi 0, %s45
    %s65 = sphi 0, %s65
    %s67 = sphi 0, %s65
    %s68 = sphi 0, %s67
    %s82 = sphi 0, %s68
    %s88 = sphi 0, %s90
    %s91 = sphi 0, %s88
    %s92 = sphi 0, %s91
    %s108 = sphi 0, %s92
    %s114 = sphi 0, %s116
    %s117 = sphi 0, %s114
    %s118 = sphi 0, %s117
    %s134 = sphi 0, %s118
    %s142 = sphi 0, %s144
    %s145 = sphi 0, %s142
    %s146 = sphi 0, %s145
    %s162 = sphi 0, %s146
  $region4: #{encoder_forward.3} parent=0 // loop_header_branch
    %13 = sbr.rel (%p11) target = $region8
  $region5: #{encoder_forward.3} parent=0 // loop_body
    %s15 = ssub.s32 %s10, 1
    %s16 = ssub.s32 %s10, 2
    %s26 = sadd.s32 1, %s19
    %p27 = scmp.ge.s32.totalorder %s26, 1
    %s28 = scalar_select %p27, 0, %s26
    %s29 = sadd.s32 1, %s18
    %s30 = scalar_select %p27, %s29, %s18
    %p31 = scmp.ge.s32.totalorder %s30, 1
    %s32 = scalar_select %p31, 0, %s30
    %s33 = sadd.s32 1, %s17
    %s34 = scalar_select %p31, %s33, %s17
    %p35 = scmp.ge.s32.totalorder %s34, 2
    %s36 = scalar_select %p35, 0, %s34
    %s37 = ssub.s32 %s17, %s36
    %s38 = ssub.s32 %s19, %s28
    %s39 = sor.u32 %s37, %s38
    %p40 = scmp.eq.s32.totalorder %s39, 0
    %s42 = sadd.s32 %s41, 1
    %s43 = scalar_select %p40, %s41, %s42
    %p46 = pneg %p40
    %p47 = scmp.eq.s32.totalorder %s10, 1
    %p48 = por %p46, %p47
    %p49 = scmp.ne.s32.totalorder %s41, %s44
    %p50 = scmp.eq.s32.totalorder %s10, 0
    %p51 = por %p49, %p50
    %p52 = scmp.ne.s32.totalorder %s41, %s44
    %p53 = scmp.eq.s32.totalorder %s15, 1
    %p54 = por %p52, %p53
    %p55 = scmp.ne.s32.totalorder %s44, %s45
    %p56 = scmp.eq.s32.totalorder %s15, 0
    %p57 = por %p55, %p56
    %p58 = scmp.ne.s32.totalorder %s44, %s45
    %p59 = scmp.eq.s32.totalorder %s16, 1
    %p60 = por %p58, %p59
    %p62 = scmp.ne.s32.totalorder %s45, %s61
    %p63 = scmp.eq.s32.totalorder %s16, 0
    %p64 = por %p62, %p63
    %s66 = sadd.s32 %s65, 1
    %p69 = scmp.eq.s32.totalorder %s10, 1
    %p70 = scmp.ne.s32.totalorder %s65, %s67
    %p71 = scmp.eq.s32.totalorder %s10, 0
    %p72 = por %p70, %p71
    %p73 = scmp.ne.s32.totalorder %s65, %s67
    %p74 = scmp.eq.s32.totalorder %s15, 1
    %p75 = por %p73, %p74
    %p76 = scmp.ne.s32.totalorder %s67, %s68
    %p77 = scmp.eq.s32.totalorder %s15, 0
    %p78 = por %p76, %p77
    %p79 = scmp.ne.s32.totalorder %s67, %s68
    %p80 = scmp.eq.s32.totalorder %s16, 1
    %p81 = por %p79, %p80
    %p83 = scmp.ne.s32.totalorder %s68, %s82
    %p84 = scmp.eq.s32.totalorder %s16, 0
    %p85 = por %p83, %p84
    %s86 = ssub.s32 %s18, %s32
    %p87 = scmp.eq.s32.totalorder %s86, 0
    %s89 = sadd.s32 %s88, 1
    %s90 = scalar_select %p87, %s88, %s89
    %p93 = pneg %p87
    %p94 = scmp.eq.s32.totalorder %s10, 1
    %p95 = por %p93, %p94
    %p96 = scmp.ne.s32.totalorder %s88, %s91
    %p97 = scmp.eq.s32.totalorder %s10, 0
    %p98 = por %p96, %p97
    %p99 = scmp.ne.s32.totalorder %s88, %s91
    %p100 = scmp.eq.s32.totalorder %s15, 1
    %p101 = por %p99, %p100
    %p102 = scmp.ne.s32.totalorder %s91, %s92
    %p103 = scmp.eq.s32.totalorder %s15, 0
    %p104 = por %p102, %p103
    %p105 = scmp.ne.s32.totalorder %s91, %s92
    %p106 = scmp.eq.s32.totalorder %s16, 1
    %p107 = por %p105, %p106
    %p109 = scmp.ne.s32.totalorder %s92, %s108
    %p110 = scmp.eq.s32.totalorder %s16, 0
    %p111 = por %p109, %p110
    %s112 = ssub.s32 %s18, %s32
    %p113 = scmp.eq.s32.totalorder %s112, 0
    %s115 = sadd.s32 %s114, 1
    %s116 = scalar_select %p113, %s114, %s115
    %p119 = pneg %p113
    %p120 = scmp.eq.s32.totalorder %s10, 1
    %p121 = por %p119, %p120
    %p122 = scmp.ne.s32.totalorder %s114, %s117
    %p123 = scmp.eq.s32.totalorder %s10, 0
    %p124 = por %p122, %p123
    %p125 = scmp.ne.s32.totalorder %s114, %s117
    %p126 = scmp.eq.s32.totalorder %s15, 1
    %p127 = por %p125, %p126
    %p128 = scmp.ne.s32.totalorder %s117, %s118
    %p129 = scmp.eq.s32.totalorder %s15, 0
    %p130 = por %p128, %p129
    %p131 = scmp.ne.s32.totalorder %s117, %s118
    %p132 = scmp.eq.s32.totalorder %s16, 1
    %p133 = por %p131, %p132
    %p135 = scmp.ne.s32.totalorder %s118, %s134
    %p136 = scmp.eq.s32.totalorder %s16, 0
    %p137 = por %p135, %p136
    %s138 = ssub.s32 %s17, %s36
    %s139 = ssub.s32 %s18, %s32
    %s140 = sor.u32 %s138, %s139
    %p141 = scmp.eq.s32.totalorder %s140, 0
    %s143 = sadd.s32 %s142, 1
    %s144 = scalar_select %p141, %s142, %s143
    %p147 = pneg %p141
    %p148 = scmp.eq.s32.totalorder %s10, 1
    %p149 = por %p147, %p148
    %p150 = scmp.ne.s32.totalorder %s142, %s145
    %p151 = scmp.eq.s32.totalorder %s10, 0
    %p152 = por %p150, %p151
    %p153 = scmp.ne.s32.totalorder %s142, %s145
    %p154 = scmp.eq.s32.totalorder %s15, 1
    %p155 = por %p153, %p154
    %p156 = scmp.ne.s32.totalorder %s145, %s146
    %p157 = scmp.eq.s32.totalorder %s15, 0
    %p158 = por %p156, %p157
    %p159 = scmp.ne.s32.totalorder %s145, %s146
    %p160 = scmp.eq.s32.totalorder %s16, 1
    %p161 = por %p159, %p160
    %p163 = scmp.ne.s32.totalorder %s146, %s162
    %p164 = scmp.eq.s32.totalorder %s16, 0
    %p165 = por %p163, %p164
    %p166 = scmp.le.s32.totalorder 1, %s10
    %p167 = scmp.lt.s32.totalorder %s10, 3
    %p168 = pnand %p166, %p167
    %p169 = pneg %p168
    // Predicated region
    $region9: #{encoder_forward.3} parent=5 // pred_check
      _
    $region10: #{encoder_forward.3} parent=5 // pred_check_branch
      %171 = sbr.rel (%p168) target = $region12
    $region11: #{encoder_forward.3} parent=5 // pred_region
      %s172 = ssub.s32 %s10, 1
      // Predicated region
      $region13: #{encoder_forward.3} parent=11 // pred_check
        %p173 = pneg %p78
      $region14: #{encoder_forward.3} parent=11 // pred_check_branch
        %175 = sbr.rel (%p173) target = $region16
      $region15: #{encoder_forward.3} parent=11 // pred_region
        _
      $region16: #{encoder_forward.3} parent=11 // pred_fallthru
        _
      // Predicated region
      $region17: #{encoder_forward.3} parent=11 // pred_check
        %p176 = pneg %p104
      $region18: #{encoder_forward.3} parent=11 // pred_check_branch
        %178 = sbr.rel (%p176) target = $region20
      $region19: #{encoder_forward.3} parent=11 // pred_region
        %p179 = scmp.lt.s32.totalorder %s21, 0
        %s180 = scalar_select %p179, %s21, 0
        %s181 = smul.addr %s180, 4
        %s182 = scalar_lea.vmem %s2, %s181
      $region20: #{encoder_forward.3} parent=11 // pred_fallthru
        _
      // Predicated region
      $region21: #{encoder_forward.3} parent=11 // pred_check
        %p183 = pneg %p130
      $region22: #{encoder_forward.3} parent=11 // pred_check_branch
        %185 = sbr.rel (%p183) target = $region24
      $region23: #{encoder_forward.3} parent=11 // pred_region
        %p186 = scmp.lt.s32.totalorder %s21, 0
        %s187 = scalar_select %p186, %s21, 0
        %s188 = scalar_lea.vmem %s3, %s187
      $region24: #{encoder_forward.3} parent=11 // pred_fallthru
        _
    $region12: #{encoder_forward.3} parent=5 // pred_fallthru
      _
    %p189 = scmp.lt.s32.totalorder %s10, 2
    // Predicated region
    $region25: #{encoder_forward.3} parent=5 // pred_check
      %p190 = pneg %p189
    $region26: #{encoder_forward.3} parent=5 // pred_check_branch
      %192 = sbr.rel (%p190) target = $region28
    $region27: #{encoder_forward.3} parent=5 // pred_region
      // Predicated region
      $region29: #{encoder_forward.3} parent=27 // pred_check
        %p193 = pneg %p51
      $region30: #{encoder_forward.3} parent=27 // pred_check_branch
        %195 = sbr.rel (%p193) target = $region32
      $region31: #{encoder_forward.3} parent=27 // pred_region
        %s196 = smul.u32 16, %s17
        %s197 = smul.u32 2, %s19
        %p198 = scmp.lt.s32.totalorder %s196, 31
        %s199 = scalar_select %p198, %s196, 31
        %p200 = scmp.lt.s32.totalorder %s197, 1
        %s201 = scalar_select %p200, %s197, 1
        %s202 = smul.addr %s199, 2
        %s203 = sadd.s32 %s201, %s202
        %s204 = smul.addr %s203, 4
        %s205 = scalar_lea.vmem %s0, %s204
        %s206 = smul.u32 16, %s17
        %s207 = smul.u32 2, %s19
      $region32: #{encoder_forward.3} parent=27 // pred_fallthru
        _
    $region28: #{encoder_forward.3} parent=5 // pred_fallthru
      _
    %p208 = scmp.le.s32.totalorder 1, %s10
    %p209 = scmp.lt.s32.totalorder %s10, 3
    %p210 = pnand %p208, %p209
    %p211 = pneg %p210
    // Predicated region
    $region33: #{encoder_forward.3} parent=5 // pred_check
      _
    $region34: #{encoder_forward.3} parent=5 // pred_check_branch
      %213 = sbr.rel (%p210) target = $region36
    $region35: #{encoder_forward.3} parent=5 // pred_region
      %s214 = ssub.s32 %s10, 1
      %s215 = smul.u32 16, %s20
      %s216 = smul.u32 2, %s22
      %p217 = scmp.lt.s32.totalorder %s215, 31
      %s218 = scalar_select %p217, %s215, 31
      %p219 = scmp.lt.s32.totalorder %s216, 1
      %s220 = scalar_select %p219, %s216, 1
      %s221 = smul.addr %s218, 2
      %s222 = sadd.s32 %s220, %s221
      %s223 = smul.addr %s222, 4
      %s224 = scalar_lea.vmem %s0, %s223
      %p225 = pneg %p57
      %p226 = pneg %p54
      %p227 = pneg %p78
      %p228 = pneg %p75
      %p229 = scmp.lt.s32.totalorder %s21, 0
      %s230 = scalar_select %p229, %s21, 0
      %s231 = smul.addr %s230, 4
      %s232 = scalar_lea.vmem %s2, %s231
      %p233 = pneg %p104
      %p234 = pneg %p101
      %p235 = scmp.lt.s32.totalorder %s21, 0
      %s236 = scalar_select %p235, %s21, 0
      %s237 = scalar_lea.vmem %s3, %s236
      %p238 = pneg %p130
      %p239 = pneg %p127
      %p240 = pneg %p158
      %p241 = pneg %p155
      %s242 = smul.u32 16, %s20
      %p243 = scmp.lt.s32.totalorder %s242, 31
      %s244 = scalar_select %p243, %s242, 31
      %p245 = scmp.lt.s32.totalorder %s21, 0
      %s246 = scalar_select %p245, %s21, 0
      %s247 = sadd.s32 %s246, %s244
      %s248 = smul.addr %s247, 8
      %s249 = scalar_lea.vmem %s4, %s248
      %s250 = smul.u32 16, %s20
      %s251 = smul.u32 2, %s22
      %p252 = scmp.lt.s32.totalorder %s250, 31
      %s253 = scalar_select %p252, %s250, 31
      %p254 = scmp.lt.s32.totalorder %s251, 1
      %s255 = scalar_select %p254, %s251, 1
      %s256 = smul.addr %s253, 2
      %s257 = sadd.s32 %s255, %s256
      %s258 = smul.addr %s257, 4
      %s259 = scalar_lea.vmem %s0, %s258
      %s260 = smul.u32 16, %s20
      %s261 = smul.u32 2, %s22
      %p262 = scmp.lt.s32.totalorder %s21, 0
      %s263 = scalar_select %p262, %s21, 0
      %s264 = smul.addr %s263, 4
      %s265 = scalar_lea.vmem %s2, %s264
      %p266 = scmp.lt.s32.totalorder %s21, 0
      %s267 = scalar_select %p266, %s21, 0
      %s268 = scalar_lea.vmem %s3, %s267
      %s269 = smul.u32 16, %s20
      %p270 = scmp.lt.s32.totalorder %s269, 31
      %s271 = scalar_select %p270, %s269, 31
      %p272 = scmp.lt.s32.totalorder %s21, 0
      %s273 = scalar_select %p272, %s21, 0
      %s274 = sadd.s32 %s273, %s271
      %s275 = smul.addr %s274, 8
      %s276 = scalar_lea.vmem %s4, %s275
      %s277 = smul.u32 16, %s20
      %p278 = scmp.eq.s32.totalorder %s22, 0
      // Predicated region
      $region37: #{encoder_forward.3} parent=35 // pred_check
        %p279 = pneg %p278
      $region38: #{encoder_forward.3} parent=35 // pred_check_branch
        %281 = sbr.rel (%p279) target = $region40
      $region39: #{encoder_forward.3} parent=35 // pred_region
        %282 = vst [vmem:[%s276] sm:$0xff] 0.0
        %283 = vst [vmem:[%s276 + $0x8] sm:$0xff] 0.0
        %284 = vst [vmem:[%s276 + $0x10] sm:$0xff] 0.0
        %285 = vst [vmem:[%s276 + $0x18] sm:$0xff] 0.0
        %286 = vst [vmem:[%s276 + $0x20] sm:$0xff] 0.0
        %287 = vst [vmem:[%s276 + $0x28] sm:$0xff] 0.0
        %288 = vst [vmem:[%s276 + $0x30] sm:$0xff] 0.0
        %289 = vst [vmem:[%s276 + $0x38] sm:$0xff] 0.0
        %290 = vst [vmem:[%s276 + $0x40] sm:$0xff] 0.0
        %291 = vst [vmem:[%s276 + $0x48] sm:$0xff] 0.0
        %292 = vst [vmem:[%s276 + $0x50] sm:$0xff] 0.0
        %293 = vst [vmem:[%s276 + $0x58] sm:$0xff] 0.0
        %294 = vst [vmem:[%s276 + $0x60] sm:$0xff] 0.0
        %295 = vst [vmem:[%s276 + $0x68] sm:$0xff] 0.0
        %296 = vst [vmem:[%s276 + $0x70] sm:$0xff] 0.0
        %297 = vst [vmem:[%s276 + $0x78] sm:$0xff] 0.0
      $region40: #{encoder_forward.3} parent=35 // pred_fallthru
        _
      %s298 = smul.u32 %s22, 256
      %s299 = sshra.s32 %s298, 3
      %s300 = sand.u32 %s298, 7
      %s301 = smul.addr %s299, 4
      %s302 = scalar_lea.vmem %s1, %s301
      %v303 = vld [vmem:[%s302] sm:$0xf]
      %v304 = vld [vmem:[%s302 + $0x4] sm:$0xf]
      %v305 = vld [vmem:[%s302 + $0x8] sm:$0xf]
      %v306 = vld [vmem:[%s302 + $0xc] sm:$0xf]
      %v307 = vld [vmem:[%s302 + $0x10] sm:$0xf]
      %v308 = vld [vmem:[%s302 + $0x14] sm:$0xf]
      %v309 = vld [vmem:[%s302 + $0x18] sm:$0xf]
      %v310 = vld [vmem:[%s302 + $0x1c] sm:$0xf]
      %v311 = vld [vmem:[%s302 + $0x20] sm:$0xf]
      %v312 = vld [vmem:[%s302 + $0x24] sm:$0xf]
      %v313 = vld [vmem:[%s302 + $0x28] sm:$0xf]
      %v314 = vld [vmem:[%s302 + $0x2c] sm:$0xf]
      %v315 = vld [vmem:[%s302 + $0x30] sm:$0xf]
      %v316 = vld [vmem:[%s302 + $0x34] sm:$0xf]
      %v317 = vld [vmem:[%s302 + $0x38] sm:$0xf]
      %v318 = vld [vmem:[%s302 + $0x3c] sm:$0xf]
      %v319 = vld [vmem:[%s302 + $0x40] sm:$0xf]
      %v320 = vld [vmem:[%s302 + $0x44] sm:$0xf]
      %v321 = vld [vmem:[%s302 + $0x48] sm:$0xf]
      %v322 = vld [vmem:[%s302 + $0x4c] sm:$0xf]
      %v323 = vld [vmem:[%s302 + $0x50] sm:$0xf]
      %v324 = vld [vmem:[%s302 + $0x54] sm:$0xf]
      %v325 = vld [vmem:[%s302 + $0x58] sm:$0xf]
      %v326 = vld [vmem:[%s302 + $0x5c] sm:$0xf]
      %v327 = vld [vmem:[%s302 + $0x60] sm:$0xf]
      %v328 = vld [vmem:[%s302 + $0x64] sm:$0xf]
      %v329 = vld [vmem:[%s302 + $0x68] sm:$0xf]
      %v330 = vld [vmem:[%s302 + $0x6c] sm:$0xf]
      %v331 = vld [vmem:[%s302 + $0x70] sm:$0xf]
      %v332 = vld [vmem:[%s302 + $0x74] sm:$0xf]
      %v333 = vld [vmem:[%s302 + $0x78] sm:$0xf]
      %v334 = vld [vmem:[%s302 + $0x7c] sm:$0xf]
      %v335 = vld [vmem:[%s265] sm:$0xf]
      %v336 = vld [vmem:[%s265 + $0x4] sm:$0xf]
      %v337 = vld [vmem:[%s265 + $0x8] sm:$0xf]
      %v338 = vld [vmem:[%s265 + $0xc] sm:$0xf]
      %v339 = vld [vmem:[%s265 + $0x10] sm:$0xf]
      %v340 = vld [vmem:[%s265 + $0x14] sm:$0xf]
      %v341 = vld [vmem:[%s265 + $0x18] sm:$0xf]
      %v342 = vld [vmem:[%s265 + $0x1c] sm:$0xf]
      %v343 = vld [vmem:[%s265 + $0x20] sm:$0xf]
      %v344 = vld [vmem:[%s265 + $0x24] sm:$0xf]
      %v345 = vld [vmem:[%s265 + $0x28] sm:$0xf]
      %v346 = vld [vmem:[%s265 + $0x2c] sm:$0xf]
      %v347 = vld [vmem:[%s265 + $0x30] sm:$0xf]
      %v348 = vld [vmem:[%s265 + $0x34] sm:$0xf]
      %v349 = vld [vmem:[%s265 + $0x38] sm:$0xf]
      %v350 = vld [vmem:[%s265 + $0x3c] sm:$0xf]
      %v383 = vunpack.c.l.b16 %v303
      %v384 = vunpack.c.l.b16 %v304
      %v385 = vunpack.c.l.b16 %v305
      %v386 = vunpack.c.l.b16 %v306
      %v387 = vunpack.c.l.b16 %v307
      %v388 = vunpack.c.l.b16 %v308
      %v389 = vunpack.c.l.b16 %v309
      %v390 = vunpack.c.l.b16 %v310
      %v391 = vunpack.c.l.b16 %v311
      %v392 = vunpack.c.l.b16 %v312
      %v393 = vunpack.c.l.b16 %v313
      %v394 = vunpack.c.l.b16 %v314
      %v395 = vunpack.c.l.b16 %v315
      %v396 = vunpack.c.l.b16 %v316
      %v397 = vunpack.c.l.b16 %v317
      %v398 = vunpack.c.l.b16 %v318
      %v399 = vunpack.c.l.b16 %v319
      %v400 = vunpack.c.l.b16 %v320
      %v401 = vunpack.c.l.b16 %v321
      %v402 = vunpack.c.l.b16 %v322
      %v403 = vunpack.c.l.b16 %v323
      %v404 = vunpack.c.l.b16 %v324
      %v405 = vunpack.c.l.b16 %v325
      %v406 = vunpack.c.l.b16 %v326
      %v407 = vunpack.c.l.b16 %v327
      %v408 = vunpack.c.l.b16 %v328
      %v409 = vunpack.c.l.b16 %v329
      %v410 = vunpack.c.l.b16 %v330
      %v411 = vunpack.c.l.b16 %v331
      %v412 = vunpack.c.l.b16 %v332
      %v413 = vunpack.c.l.b16 %v333
      %v414 = vunpack.c.l.b16 %v334
      %v415 = vpack.c.b16 %v384, %v383
      %v416 = vpack.c.b16 %v386, %v385
      %v417 = vpack.c.b16 %v388, %v387
      %v418 = vpack.c.b16 %v390, %v389
      %v419 = vpack.c.b16 %v392, %v391
      %v420 = vpack.c.b16 %v394, %v393
      %v421 = vpack.c.b16 %v396, %v395
      %v422 = vpack.c.b16 %v398, %v397
      %v423 = vpack.c.b16 %v400, %v399
      %v424 = vpack.c.b16 %v402, %v401
      %v425 = vpack.c.b16 %v404, %v403
      %v426 = vpack.c.b16 %v406, %v405
      %v427 = vpack.c.b16 %v408, %v407
      %v428 = vpack.c.b16 %v410, %v409
      %v429 = vpack.c.b16 %v412, %v411
      %v430 = vpack.c.b16 %v414, %v413
      %v463 = vunpack.c.l.b16 %v335
      %v464 = vunpack.c.l.b16 %v336
      %v465 = vunpack.c.l.b16 %v337
      %v466 = vunpack.c.l.b16 %v338
      %v467 = vunpack.c.l.b16 %v339
      %v468 = vunpack.c.l.b16 %v340
      %v469 = vunpack.c.l.b16 %v341
      %v470 = vunpack.c.l.b16 %v342
      %v471 = vunpack.c.l.b16 %v343
      %v472 = vunpack.c.l.b16 %v344
      %v473 = vunpack.c.l.b16 %v345
      %v474 = vunpack.c.l.b16 %v346
      %v475 = vunpack.c.l.b16 %v347
      %v476 = vunpack.c.l.b16 %v348
      %v477 = vunpack.c.l.b16 %v349
      %v478 = vunpack.c.l.b16 %v350
      %v479 = vpack.c.b16 %v464, %v463
      %v480 = vpack.c.b16 %v466, %v465
      %v481 = vpack.c.b16 %v468, %v467
      %v482 = vpack.c.b16 %v470, %v469
      %v483 = vpack.c.b16 %v472, %v471
      %v484 = vpack.c.b16 %v474, %v473
      %v485 = vpack.c.b16 %v476, %v475
      %v486 = vpack.c.b16 %v478, %v477
      %495 = vmatpush.bf16.msra.mxu0 %v486
      %496 = vmatpush.bf16.msra.mxu0 %v485
      %497 = vmatpush.bf16.msra.mxu0 %v484
      %498 = vmatpush.bf16.msra.mxu0 %v483
      %499 = vmatpush.bf16.msra.mxu0 %v482
      %500 = vmatpush.bf16.msra.mxu0 %v481
      %501 = vmatpush.bf16.msra.mxu0 %v480
      %502 = vmatpush.bf16.msra.mxu0 %v479
      %503 = vmatmul.bf16.gmra.mxu0 %v415
      %v504 = vpop.f32.mrf.mxu0
      %v505 = vadd.f32 0.0, %v504
      %v506 = vpop.f32.mrf.mxu0
      %v507 = vadd.f32 0.0, %v506
      %508 = vmatmul.bf16.gmra.mxu0 %v416
      %v509 = vpop.f32.mrf.mxu0
      %v510 = vadd.f32 0.0, %v509
      %v511 = vpop.f32.mrf.mxu0
      %v512 = vadd.f32 0.0, %v511
      %513 = vmatmul.bf16.gmra.mxu0 %v417
      %v514 = vpop.f32.mrf.mxu0
      %v515 = vadd.f32 0.0, %v514
      %v516 = vpop.f32.mrf.mxu0
      %v517 = vadd.f32 0.0, %v516
      %518 = vmatmul.bf16.gmra.mxu0 %v418
      %v519 = vpop.f32.mrf.mxu0
      %v520 = vadd.f32 0.0, %v519
      %v521 = vpop.f32.mrf.mxu0
      %v522 = vadd.f32 0.0, %v521
      %523 = vmatmul.bf16.gmra.mxu0 %v419
      %v524 = vpop.f32.mrf.mxu0
      %v525 = vadd.f32 0.0, %v524
      %v526 = vpop.f32.mrf.mxu0
      %v527 = vadd.f32 0.0, %v526
      %528 = vmatmul.bf16.gmra.mxu0 %v420
      %v529 = vpop.f32.mrf.mxu0
      %v530 = vadd.f32 0.0, %v529
      %v531 = vpop.f32.mrf.mxu0
      %v532 = vadd.f32 0.0, %v531
      %533 = vmatmul.bf16.gmra.mxu0 %v421
      %v534 = vpop.f32.mrf.mxu0
      %v535 = vadd.f32 0.0, %v534
      %v536 = vpop.f32.mrf.mxu0
      %v537 = vadd.f32 0.0, %v536
      %538 = vmatmul.bf16.gmra.mxu0 %v422
      %v539 = vpop.f32.mrf.mxu0
      %v540 = vadd.f32 0.0, %v539
      %v541 = vpop.f32.mrf.mxu0
      %v542 = vadd.f32 0.0, %v541
      %543 = vmatmul.bf16.gmra.mxu0 %v423
      %v544 = vpop.f32.mrf.mxu0
      %v545 = vadd.f32 0.0, %v544
      %v546 = vpop.f32.mrf.mxu0
      %v547 = vadd.f32 0.0, %v546
      %548 = vmatmul.bf16.gmra.mxu0 %v424
      %v549 = vpop.f32.mrf.mxu0
      %v550 = vadd.f32 0.0, %v549
      %v551 = vpop.f32.mrf.mxu0
      %v552 = vadd.f32 0.0, %v551
      %553 = vmatmul.bf16.gmra.mxu0 %v425
      %v554 = vpop.f32.mrf.mxu0
      %v555 = vadd.f32 0.0, %v554
      %v556 = vpop.f32.mrf.mxu0
      %v557 = vadd.f32 0.0, %v556
      %558 = vmatmul.bf16.gmra.mxu0 %v426
      %v559 = vpop.f32.mrf.mxu0
      %v560 = vadd.f32 0.0, %v559
      %v561 = vpop.f32.mrf.mxu0
      %v562 = vadd.f32 0.0, %v561
      %563 = vmatmul.bf16.gmra.mxu0 %v427
      %v564 = vpop.f32.mrf.mxu0
      %v565 = vadd.f32 0.0, %v564
      %v566 = vpop.f32.mrf.mxu0
      %v567 = vadd.f32 0.0, %v566
      %568 = vmatmul.bf16.gmra.mxu0 %v428
      %v569 = vpop.f32.mrf.mxu0
      %v570 = vadd.f32 0.0, %v569
      %v571 = vpop.f32.mrf.mxu0
      %v572 = vadd.f32 0.0, %v571
      %573 = vmatmul.bf16.gmra.mxu0 %v429
      %v574 = vpop.f32.mrf.mxu0
      %v575 = vadd.f32 0.0, %v574
      %v576 = vpop.f32.mrf.mxu0
      %v577 = vadd.f32 0.0, %v576
      %578 = vmatmul.bf16.gmra.mxu0 %v430
      %v579 = vpop.f32.mrf.mxu0
      %v580 = vadd.f32 0.0, %v579
      %v581 = vpop.f32.mrf.mxu0
      %v582 = vadd.f32 0.0, %v581
      %583 = vdwg.mxu0
      %v584 = vpack.c.bf16 %v507, %v505
      %v585 = vpack.c.bf16 %v512, %v510
      %v586 = vpack.c.bf16 %v517, %v515
      %v587 = vpack.c.bf16 %v522, %v520
      %v588 = vpack.c.bf16 %v527, %v525
      %v589 = vpack.c.bf16 %v532, %v530
      %v590 = vpack.c.bf16 %v537, %v535
      %v591 = vpack.c.bf16 %v542, %v540
      %v592 = vpack.c.bf16 %v547, %v545
      %v593 = vpack.c.bf16 %v552, %v550
      %v594 = vpack.c.bf16 %v557, %v555
      %v595 = vpack.c.bf16 %v562, %v560
      %v596 = vpack.c.bf16 %v567, %v565
      %v597 = vpack.c.bf16 %v572, %v570
      %v598 = vpack.c.bf16 %v577, %v575
      %v599 = vpack.c.bf16 %v582, %v580
      %v600 = vld [vmem:[%s276] sm:$0xff]
      %v601 = vld [vmem:[%s276 + $0x8] sm:$0xff]
      %v602 = vld [vmem:[%s276 + $0x10] sm:$0xff]
      %v603 = vld [vmem:[%s276 + $0x18] sm:$0xff]
      %v604 = vld [vmem:[%s276 + $0x20] sm:$0xff]
      %v605 = vld [vmem:[%s276 + $0x28] sm:$0xff]
      %v606 = vld [vmem:[%s276 + $0x30] sm:$0xff]
      %v607 = vld [vmem:[%s276 + $0x38] sm:$0xff]
      %v608 = vld [vmem:[%s276 + $0x40] sm:$0xff]
      %v609 = vld [vmem:[%s276 + $0x48] sm:$0xff]
      %v610 = vld [vmem:[%s276 + $0x50] sm:$0xff]
      %v611 = vld [vmem:[%s276 + $0x58] sm:$0xff]
      %v612 = vld [vmem:[%s276 + $0x60] sm:$0xff]
      %v613 = vld [vmem:[%s276 + $0x68] sm:$0xff]
      %v614 = vld [vmem:[%s276 + $0x70] sm:$0xff]
      %v615 = vld [vmem:[%s276 + $0x78] sm:$0xff]
      %v616 = vld [vmem:[%s259] sm:$0xff]
      %v617 = vld [vmem:[%s259 + $0x8] sm:$0xff]
      %v618 = vld [vmem:[%s259 + $0x10] sm:$0xff]
      %v619 = vld [vmem:[%s259 + $0x18] sm:$0xff]
      %v620 = vld [vmem:[%s259 + $0x20] sm:$0xff]
      %v621 = vld [vmem:[%s259 + $0x28] sm:$0xff]
      %v622 = vld [vmem:[%s259 + $0x30] sm:$0xff]
      %v623 = vld [vmem:[%s259 + $0x38] sm:$0xff]
      %v624 = vld [vmem:[%s259 + $0x40] sm:$0xff]
      %v625 = vld [vmem:[%s259 + $0x48] sm:$0xff]
      %v626 = vld [vmem:[%s259 + $0x50] sm:$0xff]
      %v627 = vld [vmem:[%s259 + $0x58] sm:$0xff]
      %v628 = vld [vmem:[%s259 + $0x60] sm:$0xff]
      %v629 = vld [vmem:[%s259 + $0x68] sm:$0xff]
      %v630 = vld [vmem:[%s259 + $0x70] sm:$0xff]
      %v631 = vld [vmem:[%s259 + $0x78] sm:$0xff]
      %v648 = vunpack.c.l.b16 %v616
      %v649 = vunpack.c.h.b16 %v616
      %v650 = vunpack.c.l.b16 %v617
      %v651 = vunpack.c.h.b16 %v617
      %v652 = vunpack.c.l.b16 %v618
      %v653 = vunpack.c.h.b16 %v618
      %v654 = vunpack.c.l.b16 %v619
      %v655 = vunpack.c.h.b16 %v619
      %v656 = vunpack.c.l.b16 %v620
      %v657 = vunpack.c.h.b16 %v620
      %v658 = vunpack.c.l.b16 %v621
      %v659 = vunpack.c.h.b16 %v621
      %v660 = vunpack.c.l.b16 %v622
      %v661 = vunpack.c.h.b16 %v622
      %v662 = vunpack.c.l.b16 %v623
      %v663 = vunpack.c.h.b16 %v623
      %v664 = vunpack.c.l.b16 %v624
      %v665 = vunpack.c.h.b16 %v624
      %v666 = vunpack.c.l.b16 %v625
      %v667 = vunpack.c.h.b16 %v625
      %v668 = vunpack.c.l.b16 %v626
      %v669 = vunpack.c.h.b16 %v626
      %v670 = vunpack.c.l.b16 %v627
      %v671 = vunpack.c.h.b16 %v627
      %v672 = vunpack.c.l.b16 %v628
      %v673 = vunpack.c.h.b16 %v628
      %v674 = vunpack.c.l.b16 %v629
      %v675 = vunpack.c.h.b16 %v629
      %v676 = vunpack.c.l.b16 %v630
      %v677 = vunpack.c.h.b16 %v630
      %v678 = vunpack.c.l.b16 %v631
      %v679 = vunpack.c.h.b16 %v631
      %v680 = vpack.c.b16 %v650, %v648
      %v681 = vpack.c.b16 %v651, %v649
      %v682 = vpack.c.b16 %v654, %v652
      %v683 = vpack.c.b16 %v655, %v653
      %v684 = vpack.c.b16 %v658, %v656
      %v685 = vpack.c.b16 %v659, %v657
      %v686 = vpack.c.b16 %v662, %v660
      %v687 = vpack.c.b16 %v663, %v661
      %v688 = vpack.c.b16 %v666, %v664
      %v689 = vpack.c.b16 %v667, %v665
      %v690 = vpack.c.b16 %v670, %v668
      %v691 = vpack.c.b16 %v671, %v669
      %v692 = vpack.c.b16 %v674, %v672
      %v693 = vpack.c.b16 %v675, %v673
      %v694 = vpack.c.b16 %v678, %v676
      %v695 = vpack.c.b16 %v679, %v677
      %712 = vmatpush.bf16.msra.mxu0 %v591
      %713 = vmatpush.bf16.msra.mxu0 %v590
      %714 = vmatpush.bf16.msra.mxu0 %v589
      %715 = vmatpush.bf16.msra.mxu0 %v588
      %716 = vmatpush.bf16.msra.mxu0 %v587
      %717 = vmatpush.bf16.msra.mxu0 %v586
      %718 = vmatpush.bf16.msra.mxu0 %v585
      %719 = vmatpush.bf16.msra.mxu0 %v584
      %720 = vmatmul.bf16.gmra.mxu0 %v680
      %v721 = vpop.f32.mrf.mxu0
      %v722 = vadd.f32 0.0, %v721
      %v723 = vpop.f32.mrf.mxu0
      %v724 = vadd.f32 0.0, %v723
      %725 = vmatmul.bf16.gmra.mxu0 %v682
      %v726 = vpop.f32.mrf.mxu0
      %v727 = vadd.f32 0.0, %v726
      %v728 = vpop.f32.mrf.mxu0
      %v729 = vadd.f32 0.0, %v728
      %730 = vmatmul.bf16.gmra.mxu0 %v684
      %v731 = vpop.f32.mrf.mxu0
      %v732 = vadd.f32 0.0, %v731
      %v733 = vpop.f32.mrf.mxu0
      %v734 = vadd.f32 0.0, %v733
      %735 = vmatmul.bf16.gmra.mxu0 %v686
      %v736 = vpop.f32.mrf.mxu0
      %v737 = vadd.f32 0.0, %v736
      %v738 = vpop.f32.mrf.mxu0
      %v739 = vadd.f32 0.0, %v738
      %740 = vmatmul.bf16.gmra.mxu0 %v688
      %v741 = vpop.f32.mrf.mxu0
      %v742 = vadd.f32 0.0, %v741
      %v743 = vpop.f32.mrf.mxu0
      %v744 = vadd.f32 0.0, %v743
      %745 = vmatmul.bf16.gmra.mxu0 %v690
      %v746 = vpop.f32.mrf.mxu0
      %v747 = vadd.f32 0.0, %v746
      %v748 = vpop.f32.mrf.mxu0
      %v749 = vadd.f32 0.0, %v748
      %750 = vmatmul.bf16.gmra.mxu0 %v692
      %v751 = vpop.f32.mrf.mxu0
      %v752 = vadd.f32 0.0, %v751
      %v753 = vpop.f32.mrf.mxu0
      %v754 = vadd.f32 0.0, %v753
      %755 = vmatmul.bf16.gmra.mxu0 %v694
      %v756 = vpop.f32.mrf.mxu0
      %v757 = vadd.f32 0.0, %v756
      %v758 = vpop.f32.mrf.mxu0
      %v759 = vadd.f32 0.0, %v758
      %760 = vdwg.mxu0
      %761 = vmatpush.bf16.msra.mxu0 %v599
      %762 = vmatpush.bf16.msra.mxu0 %v598
      %763 = vmatpush.bf16.msra.mxu0 %v597
      %764 = vmatpush.bf16.msra.mxu0 %v596
      %765 = vmatpush.bf16.msra.mxu0 %v595
      %766 = vmatpush.bf16.msra.mxu0 %v594
      %767 = vmatpush.bf16.msra.mxu0 %v593
      %768 = vmatpush.bf16.msra.mxu0 %v592
      %769 = vmatmul.bf16.gmra.mxu0 %v681
      %v770 = vpop.f32.mrf.mxu0
      %v771 = vadd.f32 %v722, %v770
      %v772 = vpop.f32.mrf.mxu0
      %v773 = vadd.f32 %v724, %v772
      %774 = vmatmul.bf16.gmra.mxu0 %v683
      %v775 = vpop.f32.mrf.mxu0
      %v776 = vadd.f32 %v727, %v775
      %v777 = vpop.f32.mrf.mxu0
      %v778 = vadd.f32 %v729, %v777
      %779 = vmatmul.bf16.gmra.mxu0 %v685
      %v780 = vpop.f32.mrf.mxu0
      %v781 = vadd.f32 %v732, %v780
      %v782 = vpop.f32.mrf.mxu0
      %v783 = vadd.f32 %v734, %v782
      %784 = vmatmul.bf16.gmra.mxu0 %v687
      %v785 = vpop.f32.mrf.mxu0
      %v786 = vadd.f32 %v737, %v785
      %v787 = vpop.f32.mrf.mxu0
      %v788 = vadd.f32 %v739, %v787
      %789 = vmatmul.bf16.gmra.mxu0 %v689
      %v790 = vpop.f32.mrf.mxu0
      %v791 = vadd.f32 %v742, %v790
      %v792 = vpop.f32.mrf.mxu0
      %v793 = vadd.f32 %v744, %v792
      %794 = vmatmul.bf16.gmra.mxu0 %v691
      %v795 = vpop.f32.mrf.mxu0
      %v796 = vadd.f32 %v747, %v795
      %v797 = vpop.f32.mrf.mxu0
      %v798 = vadd.f32 %v749, %v797
      %799 = vmatmul.bf16.gmra.mxu0 %v693
      %v800 = vpop.f32.mrf.mxu0
      %v801 = vadd.f32 %v752, %v800
      %v802 = vpop.f32.mrf.mxu0
      %v803 = vadd.f32 %v754, %v802
      %804 = vmatmul.bf16.gmra.mxu0 %v695
      %v805 = vpop.f32.mrf.mxu0
      %v806 = vadd.f32 %v757, %v805
      %v807 = vpop.f32.mrf.mxu0
      %v808 = vadd.f32 %v759, %v807
      %809 = vdwg.mxu0
      %v810 = vadd.f32 %v600, %v771
      %v811 = vadd.f32 %v601, %v773
      %v812 = vadd.f32 %v602, %v776
      %v813 = vadd.f32 %v603, %v778
      %v814 = vadd.f32 %v604, %v781
      %v815 = vadd.f32 %v605, %v783
      %v816 = vadd.f32 %v606, %v786
      %v817 = vadd.f32 %v607, %v788
      %v818 = vadd.f32 %v608, %v791
      %v819 = vadd.f32 %v609, %v793
      %v820 = vadd.f32 %v610, %v796
      %v821 = vadd.f32 %v611, %v798
      %v822 = vadd.f32 %v612, %v801
      %v823 = vadd.f32 %v613, %v803
      %v824 = vadd.f32 %v614, %v806
      %v825 = vadd.f32 %v615, %v808
      %826 = vst [vmem:[%s276] sm:$0xff] %v810
      %827 = vst [vmem:[%s276 + $0x8] sm:$0xff] %v811
      %828 = vst [vmem:[%s276 + $0x10] sm:$0xff] %v812
      %829 = vst [vmem:[%s276 + $0x18] sm:$0xff] %v813
      %830 = vst [vmem:[%s276 + $0x20] sm:$0xff] %v814
      %831 = vst [vmem:[%s276 + $0x28] sm:$0xff] %v815
      %832 = vst [vmem:[%s276 + $0x30] sm:$0xff] %v816
      %833 = vst [vmem:[%s276 + $0x38] sm:$0xff] %v817
      %834 = vst [vmem:[%s276 + $0x40] sm:$0xff] %v818
      %835 = vst [vmem:[%s276 + $0x48] sm:$0xff] %v819
      %836 = vst [vmem:[%s276 + $0x50] sm:$0xff] %v820
      %837 = vst [vmem:[%s276 + $0x58] sm:$0xff] %v821
      %838 = vst [vmem:[%s276 + $0x60] sm:$0xff] %v822
      %839 = vst [vmem:[%s276 + $0x68] sm:$0xff] %v823
      %840 = vst [vmem:[%s276 + $0x70] sm:$0xff] %v824
      %841 = vst [vmem:[%s276 + $0x78] sm:$0xff] %v825
      // Predicated region
      $region41: #{encoder_forward.3} parent=35 // pred_check
        %p842 = pneg %p278
      $region42: #{encoder_forward.3} parent=35 // pred_check_branch
        %844 = sbr.rel (%p842) target = $region44
      $region43: #{encoder_forward.3} parent=35 // pred_region
        %v845 = vld [vmem:[%s276] sm:$0xff]
        %v846 = vld [vmem:[%s276 + $0x8] sm:$0xff]
        %v847 = vld [vmem:[%s276 + $0x10] sm:$0xff]
        %v848 = vld [vmem:[%s276 + $0x18] sm:$0xff]
        %v849 = vld [vmem:[%s276 + $0x20] sm:$0xff]
        %v850 = vld [vmem:[%s276 + $0x28] sm:$0xff]
        %v851 = vld [vmem:[%s276 + $0x30] sm:$0xff]
        %v852 = vld [vmem:[%s276 + $0x38] sm:$0xff]
        %v853 = vld [vmem:[%s276 + $0x40] sm:$0xff]
        %v854 = vld [vmem:[%s276 + $0x48] sm:$0xff]
        %v855 = vld [vmem:[%s276 + $0x50] sm:$0xff]
        %v856 = vld [vmem:[%s276 + $0x58] sm:$0xff]
        %v857 = vld [vmem:[%s276 + $0x60] sm:$0xff]
        %v858 = vld [vmem:[%s276 + $0x68] sm:$0xff]
        %v859 = vld [vmem:[%s276 + $0x70] sm:$0xff]
        %v860 = vld [vmem:[%s276 + $0x78] sm:$0xff]
        %v861 = vld [vmem:[%s268] sm:$0x1]
        %v863 = vperm.slane %v861, 0
        %v865 = vadd.f32 %v845, %v863
        %v866 = vadd.f32 %v846, %v863
        %v867 = vadd.f32 %v847, %v863
        %v868 = vadd.f32 %v848, %v863
        %v869 = vadd.f32 %v849, %v863
        %v870 = vadd.f32 %v850, %v863
        %v871 = vadd.f32 %v851, %v863
        %v872 = vadd.f32 %v852, %v863
        %v873 = vadd.f32 %v853, %v863
        %v874 = vadd.f32 %v854, %v863
        %v875 = vadd.f32 %v855, %v863
        %v876 = vadd.f32 %v856, %v863
        %v877 = vadd.f32 %v857, %v863
        %v878 = vadd.f32 %v858, %v863
        %v879 = vadd.f32 %v859, %v863
        %v880 = vadd.f32 %v860, %v863
        %881 = vst [vmem:[%s276] sm:$0xff] %v865
        %882 = vst [vmem:[%s276 + $0x8] sm:$0xff] %v866
        %883 = vst [vmem:[%s276 + $0x10] sm:$0xff] %v867
        %884 = vst [vmem:[%s276 + $0x18] sm:$0xff] %v868
        %885 = vst [vmem:[%s276 + $0x20] sm:$0xff] %v869
        %886 = vst [vmem:[%s276 + $0x28] sm:$0xff] %v870
        %887 = vst [vmem:[%s276 + $0x30] sm:$0xff] %v871
        %888 = vst [vmem:[%s276 + $0x38] sm:$0xff] %v872
        %889 = vst [vmem:[%s276 + $0x40] sm:$0xff] %v873
        %890 = vst [vmem:[%s276 + $0x48] sm:$0xff] %v874
        %891 = vst [vmem:[%s276 + $0x50] sm:$0xff] %v875
        %892 = vst [vmem:[%s276 + $0x58] sm:$0xff] %v876
        %893 = vst [vmem:[%s276 + $0x60] sm:$0xff] %v877
        %894 = vst [vmem:[%s276 + $0x68] sm:$0xff] %v878
        %895 = vst [vmem:[%s276 + $0x70] sm:$0xff] %v879
        %896 = vst [vmem:[%s276 + $0x78] sm:$0xff] %v880
      $region44: #{encoder_forward.3} parent=35 // pred_fallthru
        _
      %s897 = smul.u32 16, %s20
      %p898 = scmp.lt.s32.totalorder %s897, 31
      %s899 = scalar_select %p898, %s897, 31
      %p900 = scmp.lt.s32.totalorder %s21, 0
      %s901 = scalar_select %p900, %s21, 0
      %s902 = sadd.s32 %s901, %s899
      %s903 = smul.addr %s902, 8
      %s904 = scalar_lea.vmem %s4, %s903
      // Predicated region
      $region45: #{encoder_forward.3} parent=35 // pred_check
        %p905 = pneg %p155
      $region46: #{encoder_forward.3} parent=35 // pred_check_branch
        %907 = sbr.rel (%p905) target = $region48
      $region47: #{encoder_forward.3} parent=35 // pred_region
        %s908 = smul.u32 16, %s20
      $region48: #{encoder_forward.3} parent=35 // pred_fallthru
        _
    $region36: #{encoder_forward.3} parent=5 // pred_fallthru
      _
    %p909 = scmp.le.s32.totalorder 2, %s10
    // Predicated region
    $region49: #{encoder_forward.3} parent=5 // pred_check
      %p910 = pneg %p909
    $region50: #{encoder_forward.3} parent=5 // pred_check_branch
      %912 = sbr.rel (%p910) target = $region52
    $region51: #{encoder_forward.3} parent=5 // pred_region
      %s913 = ssub.s32 %s10, 2
      // Predicated region
      $region53: #{encoder_forward.3} parent=51 // pred_check
        %p914 = pneg %p161
      $region54: #{encoder_forward.3} parent=51 // pred_check_branch
        %916 = sbr.rel (%p914) target = $region56
      $region55: #{encoder_forward.3} parent=51 // pred_region
        %s917 = smul.u32 16, %s23
        %p918 = scmp.lt.s32.totalorder %s917, 31
        %s919 = scalar_select %p918, %s917, 31
        %p920 = scmp.lt.s32.totalorder %s24, 0
        %s921 = scalar_select %p920, %s24, 0
        %s922 = sadd.s32 %s921, %s919
        %s923 = smul.addr %s922, 8
        %s924 = scalar_lea.vmem %s4, %s923
      $region56: #{encoder_forward.3} parent=51 // pred_fallthru
        _
    $region52: #{encoder_forward.3} parent=5 // pred_fallthru
      _
  $region6: #{encoder_forward.3} parent=0 // loop_footer
    %s14 = sadd.s32 1, %s10
  $region7: #{encoder_forward.3} parent=0 // loop_footer_branch
    %9 = sbr.rel target = $region3
  $region8: #{encoder_forward.3} parent=0 // loop_exit
    _

</llo_original>
